<compile_context>
chip_gen: v5e
topology: v5e:2x2
jax: 0.10.0
libtpu: 0.0.40
codegen_flags: <defaults>
</compile_context>

<pallas_src>
import math
from functools import partial

import jax
import jax.numpy as jnp
from jax.experimental import pallas as pl
from jax.experimental.pallas import tpu as pltpu


def _attention_layer_kernel(q_ref, k_ref, v_ref,
                            wq_ref, bq_ref,
                            wk_ref, bk_ref,
                            wv_ref, bv_ref,
                            wo_ref, bo_ref,
                            *rest,
                            n_heads, d_keys, d_values,
                            compute_dtype, with_attn):
    if with_attn:
        out_ref, attn_ref, ctx_ref = rest
    else:
        out_ref, ctx_ref = rest
        attn_ref = None

    H, dk, dv = n_heads, d_keys, d_values
    N, S, D = q_ref.shape              # N = bt_tile (b,t)-rows per grid step
    NS = N * S
    d_model_out = wo_ref.shape[1]
    scale = 1.0 / math.sqrt(dk)

    # ---- fused input projections: one big-M matmul each (MXU, bf16 operands, f32 acc).
    # Operands arrive already in compute_dtype (cast in the wrapper) -> no repack here.
    q2 = q_ref[...].reshape(NS, D)
    k2 = k_ref[...].reshape(NS, D)
    v2 = v_ref[...].reshape(NS, D)

    qp = jnp.dot(q2, wq_ref[...], preferred_element_type=jnp.float32) + bq_ref[...]
    kp = jnp.dot(k2, wk_ref[...], preferred_element_type=jnp.float32) + bk_ref[...]
    vp = jnp.dot(v2, wv_ref[...], preferred_element_type=jnp.float32) + bv_ref[...]

    # Fold 1/sqrt(dk) into q once instead of scaling every (S,S) score map.
    q_h = (qp * scale).astype(compute_dtype).reshape(N, S, H * dk)
    k_h = kp.astype(compute_dtype).reshape(N, S, H * dk)
    v_h = vp.astype(compute_dtype).reshape(N, S, H * dv)

    # Static unroll over heads; each head's context lands in the (NS, H*dv) scratch so a
    # single full-K output projection can run at the end (no per-head small-K matmuls).
    for h in range(H):
        qh = q_h[:, :, h * dk:(h + 1) * dk]          # (N, S, dk)
        kh = k_h[:, :, h * dk:(h + 1) * dk]          # (N, S, dk)
        vh = v_h[:, :, h * dv:(h + 1) * dv]          # (N, S, dv)

        # Scores + softmax in f32 (VPU/EUP); MXU operands in compute_dtype.
        sc = jnp.einsum('nqd,nkd->nqk', qh, kh,
                        preferred_element_type=jnp.float32)           # (N, S, S)
        m = jnp.max(sc, axis=-1, keepdims=True)
        e = jnp.exp(sc - m)
        denom = jnp.sum(e, axis=-1, keepdims=True)
        # Exact reciprocal when the maps are returned (rows sum to 1); approx (EUP) otherwise.
        a = e * pl.reciprocal(denom, approx=(attn_ref is None))

        if attn_ref is not None:
            attn_ref[:, h] = a.astype(attn_ref.dtype)                 # (N, S, S)

        oh = jnp.einsum('nqk,nkd->nqd', a.astype(compute_dtype), vh,
                        preferred_element_type=jnp.float32)           # (N, S, dv)
        ctx_ref[:, h * dv:(h + 1) * dv] = oh.reshape(NS, dv).astype(ctx_ref.dtype)

    # Single output projection with full contraction K = H*dv (restores MXU fill).
    out = jnp.dot(ctx_ref[...], wo_ref[...],
                  preferred_element_type=jnp.float32) + bo_ref[...]
    out_ref[...] = out.reshape(N, S, d_model_out).astype(out_ref.dtype)


_FALLBACK_VMEM_LIMIT = 48 * 1024 * 1024


def _default_vmem_limit():
    """Generation-aware VMEM request: ~3/4 of physical VMEM (128 MiB on v5e/v6e -> ~96 MiB,
    64 MiB/TC on v7x -> 48 MiB). Conservative fallback if the query is unavailable."""
    try:
        cap = int(pltpu.get_tpu_info().vmem_capacity_bytes)
        return int(max(32 * 1024 * 1024, min(cap * 3 // 4, 112 * 1024 * 1024)))
    except Exception:
        return _FALLBACK_VMEM_LIMIT


def _pick_bt_tile(BT, S, D, n_heads, d_model, d_keys, d_values, with_attn,
                  vmem_budget, act_bytes=2, attn_bytes=2, target_rows=512):
    """Largest divisor of BT whose per-step footprint fits `vmem_budget`, capped so the grid
    has >= 2 steps (keeps both v7x TensorCores busy); stops once bt_tile*S >= target_rows."""
    hdk = n_heads * d_keys
    hdv = n_heads * d_values
    # Weights/biases are whole-array VMEM residents (single buffered) -> constant cost.
    weight_bytes = (D * (2 * hdk + hdv) + hdv * d_model) * act_bytes \
                   + (2 * hdk + hdv + d_model) * 4
    budget = vmem_budget - weight_bytes
    max_tile = BT if BT < 2 else max(1, BT // 2)          # >= 2 grid steps when possible
    best = 1
    for cand in range(1, max_tile + 1):
        if BT % cand:
            continue
        ns = cand * S
        blocks = 2 * (3 * ns * D * act_bytes + ns * d_model * 4)   # double-buffered q/k/v/out
        if with_attn:
            blocks += 2 * cand * n_heads * S * S * attn_bytes      # double-buffered attn block
        live = (ns * (2 * hdk + hdv) * (4 + act_bytes)             # f32 proj + bf16 copies
                + ns * hdv * act_bytes                             # ctx scratch
                + 3 * cand * S * S * 4                             # scores/exp/probs (per head)
                + ns * d_model * 4)                                # f32 out before cast
        if blocks + live > budget:
            continue
        best = cand
        if ns >= target_rows:
            break
    return best


def attention_layer_forward(queries, keys, values, params, n_heads,
                            attn_mask=None, OT_matrices=None, mix=False,
                            return_attn=False, bt_tile=None,
                            compute_dtype=jnp.bfloat16, attn_dtype=jnp.bfloat16,
                            vmem_limit_bytes=None):
    """queries/keys/values: (B, T, S, D). Returns (out, attn or None).

    Matches AttentionLayer.forward with attn_mask=None, OT_matrices=None, mix=False.
    """
    if attn_mask is not None or OT_matrices is not None:
        # TODO(synk): attn_mask / OT_matrices paths not implemented — fail loudly.
        raise NotImplementedError("attn_mask / OT_matrices paths are not implemented")
    if mix:
        raise NotImplementedError("mix=True path is not implemented")

    B, T, S, D = queries.shape
    out_dtype = queries.dtype
    wq, bq, wk, bk, wv, bv, wo, bo = params
    d_keys = wq.shape[1] // n_heads
    d_values = wv.shape[1] // n_heads
    d_model = wo.shape[1]

    if vmem_limit_bytes is None:
        vmem_limit_bytes = _default_vmem_limit()

    BT = B * T
    if bt_tile is None:
        bt_tile = _pick_bt_tile(BT, S, D, n_heads, d_model, d_keys, d_values,
                                return_attn,
                                vmem_budget=vmem_limit_bytes - 8 * 1024 * 1024,
                                act_bytes=jnp.dtype(compute_dtype).itemsize,
                                attn_bytes=jnp.dtype(attn_dtype).itemsize)
    assert BT % bt_tile == 0
    grid = (BT // bt_tile,)

    # Pre-cast activations and weights to compute_dtype outside the kernel (halves DMA and
    # the resident weight footprint); biases stay f32 (added to f32 accumulators).
    # NOTE: reshapes are layout-free when S % 8 == 0 and D % 128 == 0 (perf, not correctness).
    q2 = queries.reshape(BT, S, D).astype(compute_dtype)
    k2 = keys.reshape(BT, S, D).astype(compute_dtype)
    v2 = values.reshape(BT, S, D).astype(compute_dtype)
    wq_c = wq.astype(compute_dtype)
    wk_c = wk.astype(compute_dtype)
    wv_c = wv.astype(compute_dtype)
    wo_c = wo.astype(compute_dtype)
    bq2 = bq.reshape(1, -1).astype(jnp.float32)
    bk2 = bk.reshape(1, -1).astype(jnp.float32)
    bv2 = bv.reshape(1, -1).astype(jnp.float32)
    bo2 = bo.reshape(1, -1).astype(jnp.float32)

    kernel = partial(_attention_layer_kernel,
                     n_heads=n_heads, d_keys=d_keys, d_values=d_values,
                     compute_dtype=compute_dtype, with_attn=return_attn)

    act_spec = pl.BlockSpec((bt_tile, S, D), lambda i: (i, 0, 0))
    # Constant weights/biases: whole array resident in VMEM, single buffered — their block
    # index never changes, so a second pipeline buffer would be pure VMEM waste.
    const_spec = pl.BlockSpec(memory_space=pltpu.MemorySpace.VMEM)

    out_shapes = [jax.ShapeDtypeStruct((BT, S, d_model), out_dtype)]
    out_specs = [pl.BlockSpec((bt_tile, S, d_model), lambda i: (i, 0, 0))]
    if return_attn:
        # TODO(synk): for small S a lane-dense (BT, H, S*S) packing would avoid masked
        # partial stores; kept (BT, H, S, S) (bf16 already halves the writeback stream).
        out_shapes.append(jax.ShapeDtypeStruct((BT, n_heads, S, S), attn_dtype))
        out_specs.append(pl.BlockSpec((bt_tile, n_heads, S, S), lambda i: (i, 0, 0, 0)))

    results = pl.pallas_call(
        kernel,
        out_shape=tuple(out_shapes),
        grid_spec=pltpu.PrefetchScalarGridSpec(
            num_scalar_prefetch=0,
            grid=grid,
            in_specs=[
                act_spec, act_spec, act_spec,
                const_spec, const_spec,    # wq, bq
                const_spec, const_spec,    # wk, bk
                const_spec, const_spec,    # wv, bv
                const_spec, const_spec,    # wo, bo
            ],
            out_specs=tuple(out_specs),
            scratch_shapes=[pltpu.VMEM((bt_tile * S, n_heads * d_values), compute_dtype)],
        ),
        compiler_params=pltpu.CompilerParams(
            dimension_semantics=("parallel",),     # shards BT tiles across v7x's 2 TCs
            vmem_limit_bytes=int(vmem_limit_bytes)),
    )(q2, k2, v2, wq_c, bq2, wk_c, bk2, wv_c, bv2, wo_c, bo2)

    if return_attn:
        out2d, attn4d = results
        return (out2d.reshape(B, T, S, d_model),
                attn4d.reshape(B, T, n_heads, S, S))
    out2d = results[0] if isinstance(results, (tuple, list)) else results
    return out2d.reshape(B, T, S, d_model), None


def init_params(key, d_model, n_heads, d_keys=None, d_values=None):
    d_keys = d_keys or d_model // n_heads
    d_values = d_values or d_model // n_heads
    ks = jax.random.split(key, 8)
    sd = 0.02
    wq = sd * jax.random.normal(ks[0], (d_model, d_keys * n_heads), jnp.float32)
    bq = sd * jax.random.normal(ks[1], (d_keys * n_heads,), jnp.float32)
    wk = sd * jax.random.normal(ks[2], (d_model, d_keys * n_heads), jnp.float32)
    bk = sd * jax.random.normal(ks[3], (d_keys * n_heads,), jnp.float32)
    wv = sd * jax.random.normal(ks[4], (d_model, d_values * n_heads), jnp.float32)
    bv = sd * jax.random.normal(ks[5], (d_values * n_heads,), jnp.float32)
    wo = sd * jax.random.normal(ks[6], (d_values * n_heads, d_model), jnp.float32)
    bo = sd * jax.random.normal(ks[7], (d_model,), jnp.float32)
    return (wq, bq, wk, bk, wv, bv, wo, bo)


def _reference(queries, keys, values, params, n_heads):
    # Pure-JAX f32 reference for a sanity check.
    B, T, S, D = queries.shape
    wq, bq, wk, bk, wv, bv, wo, bo = params
    dk = wq.shape[1] // n_heads
    dv = wv.shape[1] // n_heads
    q = (queries @ wq + bq).reshape(B, T, S, n_heads, dk)
    k = (keys @ wk + bk).reshape(B, T, S, n_heads, dk)
    v = (values @ wv + bv).reshape(B, T, S, n_heads, dv)
    scores = jnp.einsum("btshe,btzhe->bthsz", q, k) / math.sqrt(dk)
    a = jax.nn.softmax(scores, axis=-1)
    o = jnp.einsum("bthsz,btzhe->btshe", a, v).reshape(B, T, S, n_heads * dv)
    return o @ wo + bo, a


if __name__ == "__main__":
    B, T, S, D, H = 2, 2, 8, 32, 4

    key = jax.random.PRNGKey(0)
    kq, kk, kv, kp = jax.random.split(key, 4)
    queries = jax.random.normal(kq, (B, T, S, D), jnp.float32)
    keys = jax.random.normal(kk, (B, T, S, D), jnp.float32)
    values = jax.random.normal(kv, (B, T, S, D), jnp.float32)
    params = init_params(kp, D, H)

    ref_out, ref_attn = _reference(queries, keys, values, params, H)

    # Default fast path: no attention-map writeback (approx EUP reciprocal).
    out, attn_none = attention_layer_forward(queries, keys, values, params, H)
    jax.block_until_ready(out)
    assert attn_none is None
    assert jnp.allclose(out, ref_out, atol=5e-3, rtol=5e-3), "output mismatch"

    # Optional attention-map path (bf16 maps, exact softmax normalization).
    out2, attn = attention_layer_forward(queries, keys, values, params, H, return_attn=True)
    jax.block_until_ready(out2)
    jax.block_until_ready(attn)
    assert jnp.allclose(out2, ref_out, atol=5e-3, rtol=5e-3), "output (attn path) mismatch"
    assert jnp.allclose(attn.astype(jnp.float32), ref_attn, atol=2e-2, rtol=2e-2), "attn mismatch"

    print("KERNEL_OK")
</pallas_src>

<mosaic_0001>
module attributes {stable_mosaic.version = 11 : i64} {
  func.func @_attention_layer_kernel(%arg0: i32, %arg1: memref<2x8x32xbf16, #tpu.memory_space<vmem>>, %arg2: memref<2x8x32xbf16, #tpu.memory_space<vmem>>, %arg3: memref<2x8x32xbf16, #tpu.memory_space<vmem>>, %arg4: memref<32x32xbf16, #tpu.memory_space<vmem>>, %arg5: memref<1x32xf32, #tpu.memory_space<vmem>>, %arg6: memref<32x32xbf16, #tpu.memory_space<vmem>>, %arg7: memref<1x32xf32, #tpu.memory_space<vmem>>, %arg8: memref<32x32xbf16, #tpu.memory_space<vmem>>, %arg9: memref<1x32xf32, #tpu.memory_space<vmem>>, %arg10: memref<32x32xbf16, #tpu.memory_space<vmem>>, %arg11: memref<1x32xf32, #tpu.memory_space<vmem>>, %arg12: memref<2x8x32xf32, #tpu.memory_space<vmem>>, %arg13: memref<16x32xbf16, #tpu.memory_space<vmem>>) attributes {dimension_semantics = [#tpu.dimension_semantics<parallel>], iteration_bounds = array<i64: 2>, scalar_prefetch = 0 : i64, scratch_operands = 1 : i64, tpu.core_type = #tpu.core_type<tc>, window_params = [{transform_indices = @transform_0, window_bounds = array<i64: 2, 8, 32>}, {transform_indices = @transform_1, window_bounds = array<i64: 2, 8, 32>}, {transform_indices = @transform_2, window_bounds = array<i64: 2, 8, 32>}, {pipeline_mode = #tpu.pipeline_mode<synchronous>, transform_indices = @transform_3, window_bounds = array<i64: 32, 32>}, {pipeline_mode = #tpu.pipeline_mode<synchronous>, transform_indices = @transform_4, window_bounds = array<i64: 1, 32>}, {pipeline_mode = #tpu.pipeline_mode<synchronous>, transform_indices = @transform_5, window_bounds = array<i64: 32, 32>}, {pipeline_mode = #tpu.pipeline_mode<synchronous>, transform_indices = @transform_6, window_bounds = array<i64: 1, 32>}, {pipeline_mode = #tpu.pipeline_mode<synchronous>, transform_indices = @transform_7, window_bounds = array<i64: 32, 32>}, {pipeline_mode = #tpu.pipeline_mode<synchronous>, transform_indices = @transform_8, window_bounds = array<i64: 1, 32>}, {pipeline_mode = #tpu.pipeline_mode<synchronous>, transform_indices = @transform_9, window_bounds = array<i64: 32, 32>}, {pipeline_mode = #tpu.pipeline_mode<synchronous>, transform_indices = @transform_10, window_bounds = array<i64: 1, 32>}, {transform_indices = @transform_11, window_bounds = array<i64: 2, 8, 32>}]} {
    %c0 = arith.constant 0 : index
    %c0_0 = arith.constant 0 : index
    %c0_1 = arith.constant 0 : index
    %0 = vector.load %arg1[%c0, %c0_0, %c0_1] : memref<2x8x32xbf16, #tpu.memory_space<vmem>>, vector<2x8x32xbf16>
    %1 = vector.shape_cast %0 : vector<2x8x32xbf16> to vector<16x32xbf16>
    %c0_2 = arith.constant 0 : index
    %c0_3 = arith.constant 0 : index
    %c0_4 = arith.constant 0 : index
    %2 = vector.load %arg2[%c0_2, %c0_3, %c0_4] : memref<2x8x32xbf16, #tpu.memory_space<vmem>>, vector<2x8x32xbf16>
    %3 = vector.shape_cast %2 : vector<2x8x32xbf16> to vector<16x32xbf16>
    %c0_5 = arith.constant 0 : index
    %c0_6 = arith.constant 0 : index
    %c0_7 = arith.constant 0 : index
    %4 = vector.load %arg3[%c0_5, %c0_6, %c0_7] : memref<2x8x32xbf16, #tpu.memory_space<vmem>>, vector<2x8x32xbf16>
    %5 = vector.shape_cast %4 : vector<2x8x32xbf16> to vector<16x32xbf16>
    %c0_8 = arith.constant 0 : index
    %c0_9 = arith.constant 0 : index
    %6 = vector.load %arg4[%c0_8, %c0_9] : memref<32x32xbf16, #tpu.memory_space<vmem>>, vector<32x32xbf16>
    %cst = arith.constant dense<0.000000e+00> : vector<16x32xf32>
    %7 = tpu.matmul %1, %6, %cst {dimension_numbers = #tpu.dot_dimension_numbers<[1], [0], [0], [1], [0, 0, 1, 1], [], []>} : vector<16x32xbf16>, vector<32x32xbf16>, vector<16x32xf32> -> vector<16x32xf32>
    %c0_10 = arith.constant 0 : index
    %c0_11 = arith.constant 0 : index
    %8 = vector.load %arg5[%c0_10, %c0_11] : memref<1x32xf32, #tpu.memory_space<vmem>>, vector<1x32xf32>
    %9 = vector.broadcast %8 : vector<1x32xf32> to vector<16x32xf32>
    %10 = arith.addf %7, %9 : vector<16x32xf32>
    %c0_12 = arith.constant 0 : index
    %c0_13 = arith.constant 0 : index
    %11 = vector.load %arg6[%c0_12, %c0_13] : memref<32x32xbf16, #tpu.memory_space<vmem>>, vector<32x32xbf16>
    %cst_14 = arith.constant dense<0.000000e+00> : vector<16x32xf32>
    %12 = tpu.matmul %3, %11, %cst_14 {dimension_numbers = #tpu.dot_dimension_numbers<[1], [0], [0], [1], [0, 0, 1, 1], [], []>} : vector<16x32xbf16>, vector<32x32xbf16>, vector<16x32xf32> -> vector<16x32xf32>
    %c0_15 = arith.constant 0 : index
    %c0_16 = arith.constant 0 : index
    %13 = vector.load %arg7[%c0_15, %c0_16] : memref<1x32xf32, #tpu.memory_space<vmem>>, vector<1x32xf32>
    %14 = vector.broadcast %13 : vector<1x32xf32> to vector<16x32xf32>
    %15 = arith.addf %12, %14 : vector<16x32xf32>
    %c0_17 = arith.constant 0 : index
    %c0_18 = arith.constant 0 : index
    %16 = vector.load %arg8[%c0_17, %c0_18] : memref<32x32xbf16, #tpu.memory_space<vmem>>, vector<32x32xbf16>
    %cst_19 = arith.constant dense<0.000000e+00> : vector<16x32xf32>
    %17 = tpu.matmul %5, %16, %cst_19 {dimension_numbers = #tpu.dot_dimension_numbers<[1], [0], [0], [1], [0, 0, 1, 1], [], []>} : vector<16x32xbf16>, vector<32x32xbf16>, vector<16x32xf32> -> vector<16x32xf32>
    %c0_20 = arith.constant 0 : index
    %c0_21 = arith.constant 0 : index
    %18 = vector.load %arg9[%c0_20, %c0_21] : memref<1x32xf32, #tpu.memory_space<vmem>>, vector<1x32xf32>
    %19 = vector.broadcast %18 : vector<1x32xf32> to vector<16x32xf32>
    %20 = arith.addf %17, %19 : vector<16x32xf32>
    %cst_22 = arith.constant 0.353553385 : f32
    %21 = vector.broadcast %cst_22 : f32 to vector<16x32xf32>
    %22 = arith.mulf %10, %21 : vector<16x32xf32>
    %23 = arith.truncf %22 : vector<16x32xf32> to vector<16x32xbf16>
    %24 = vector.shape_cast %23 : vector<16x32xbf16> to vector<2x8x32xbf16>
    %25 = arith.truncf %15 : vector<16x32xf32> to vector<16x32xbf16>
    %26 = vector.shape_cast %25 : vector<16x32xbf16> to vector<2x8x32xbf16>
    %27 = arith.truncf %20 : vector<16x32xf32> to vector<16x32xbf16>
    %28 = vector.shape_cast %27 : vector<16x32xbf16> to vector<2x8x32xbf16>
    %29 = vector.extract_strided_slice %24 {offsets = [0, 0, 0], sizes = [2, 8, 8], strides = [1, 1, 1]} : vector<2x8x32xbf16> to vector<2x8x8xbf16>
    %30 = vector.extract_strided_slice %26 {offsets = [0, 0, 0], sizes = [2, 8, 8], strides = [1, 1, 1]} : vector<2x8x32xbf16> to vector<2x8x8xbf16>
    %31 = vector.extract_strided_slice %28 {offsets = [0, 0, 0], sizes = [2, 8, 8], strides = [1, 1, 1]} : vector<2x8x32xbf16> to vector<2x8x8xbf16>
    "tpu.trace_start"() <{level = 10 : i32, message = "nqd,nkd->nqk"}> : () -> ()
    %cst_23 = arith.constant dense<0.000000e+00> : vector<2x8x8xf32>
    %32 = tpu.matmul %29, %30, %cst_23 {dimension_numbers = #tpu.dot_dimension_numbers<[2], [2], [1], [1], [0, 0, 0, 1, 1, 1], [0], [0]>} : vector<2x8x8xbf16>, vector<2x8x8xbf16>, vector<2x8x8xf32> -> vector<2x8x8xf32>
    "tpu.trace_stop"() : () -> ()
    %cst_24 = arith.constant dense<0xFF800000> : vector<2x8xf32>
    %33 = vector.multi_reduction <maximumf>, %32, %cst_24 [2] : vector<2x8x8xf32> to vector<2x8xf32>
    %34 = vector.shape_cast %33 : vector<2x8xf32> to vector<2x8x1xf32>
    %35 = vector.broadcast %34 : vector<2x8x1xf32> to vector<2x8x8xf32>
    %36 = arith.subf %32, %35 : vector<2x8x8xf32>
    %37 = math.exp %36 : vector<2x8x8xf32>
    %cst_25 = arith.constant dense<0.000000e+00> : vector<2x8xf32>
    %38 = vector.multi_reduction <add>, %37, %cst_25 [2] : vector<2x8x8xf32> to vector<2x8xf32>
    %39 = vector.shape_cast %38 : vector<2x8xf32> to vector<2x8x1xf32>
    %40 = tpu.reciprocal %39 {approx = true} : vector<2x8x1xf32> -> vector<2x8x1xf32>
    %41 = vector.broadcast %40 : vector<2x8x1xf32> to vector<2x8x8xf32>
    %42 = arith.mulf %37, %41 : vector<2x8x8xf32>
    %43 = arith.truncf %42 : vector<2x8x8xf32> to vector<2x8x8xbf16>
    "tpu.trace_start"() <{level = 10 : i32, message = "nqk,nkd->nqd"}> : () -> ()
    %cst_26 = arith.constant dense<0.000000e+00> : vector<2x8x8xf32>
    %44 = tpu.matmul %43, %31, %cst_26 {dimension_numbers = #tpu.dot_dimension_numbers<[2], [1], [1], [2], [0, 0, 0, 1, 1, 2], [0], [0]>} : vector<2x8x8xbf16>, vector<2x8x8xbf16>, vector<2x8x8xf32> -> vector<2x8x8xf32>
    "tpu.trace_stop"() : () -> ()
    %45 = vector.shape_cast %44 : vector<2x8x8xf32> to vector<16x8xf32>
    %46 = arith.truncf %45 : vector<16x8xf32> to vector<16x8xbf16>
    %c0_27 = arith.constant 0 : index
    %c0_28 = arith.constant 0 : index
    %47 = vector.load %arg13[%c0_27, %c0_28] : memref<16x32xbf16, #tpu.memory_space<vmem>>, vector<16x8xbf16>
    tpu.vector_store %arg13[%c0_27, %c0_28], %46 {strides = array<i32>} : memref<16x32xbf16, #tpu.memory_space<vmem>>, vector<16x8xbf16>,
    %48 = vector.extract_strided_slice %24 {offsets = [0, 0, 8], sizes = [2, 8, 8], strides = [1, 1, 1]} : vector<2x8x32xbf16> to vector<2x8x8xbf16>
    %49 = vector.extract_strided_slice %26 {offsets = [0, 0, 8], sizes = [2, 8, 8], strides = [1, 1, 1]} : vector<2x8x32xbf16> to vector<2x8x8xbf16>
    %50 = vector.extract_strided_slice %28 {offsets = [0, 0, 8], sizes = [2, 8, 8], strides = [1, 1, 1]} : vector<2x8x32xbf16> to vector<2x8x8xbf16>
    "tpu.trace_start"() <{level = 10 : i32, message = "nqd,nkd->nqk"}> : () -> ()
    %cst_29 = arith.constant dense<0.000000e+00> : vector<2x8x8xf32>
    %51 = tpu.matmul %48, %49, %cst_29 {dimension_numbers = #tpu.dot_dimension_numbers<[2], [2], [1], [1], [0, 0, 0, 1, 1, 1], [0], [0]>} : vector<2x8x8xbf16>, vector<2x8x8xbf16>, vector<2x8x8xf32> -> vector<2x8x8xf32>
    "tpu.trace_stop"() : () -> ()
    %cst_30 = arith.constant dense<0xFF800000> : vector<2x8xf32>
    %52 = vector.multi_reduction <maximumf>, %51, %cst_30 [2] : vector<2x8x8xf32> to vector<2x8xf32>
    %53 = vector.shape_cast %52 : vector<2x8xf32> to vector<2x8x1xf32>
    %54 = vector.broadcast %53 : vector<2x8x1xf32> to vector<2x8x8xf32>
    %55 = arith.subf %51, %54 : vector<2x8x8xf32>
    %56 = math.exp %55 : vector<2x8x8xf32>
    %cst_31 = arith.constant dense<0.000000e+00> : vector<2x8xf32>
    %57 = vector.multi_reduction <add>, %56, %cst_31 [2] : vector<2x8x8xf32> to vector<2x8xf32>
    %58 = vector.shape_cast %57 : vector<2x8xf32> to vector<2x8x1xf32>
    %59 = tpu.reciprocal %58 {approx = true} : vector<2x8x1xf32> -> vector<2x8x1xf32>
    %60 = vector.broadcast %59 : vector<2x8x1xf32> to vector<2x8x8xf32>
    %61 = arith.mulf %56, %60 : vector<2x8x8xf32>
    %62 = arith.truncf %61 : vector<2x8x8xf32> to vector<2x8x8xbf16>
    "tpu.trace_start"() <{level = 10 : i32, message = "nqk,nkd->nqd"}> : () -> ()
    %cst_32 = arith.constant dense<0.000000e+00> : vector<2x8x8xf32>
    %63 = tpu.matmul %62, %50, %cst_32 {dimension_numbers = #tpu.dot_dimension_numbers<[2], [1], [1], [2], [0, 0, 0, 1, 1, 2], [0], [0]>} : vector<2x8x8xbf16>, vector<2x8x8xbf16>, vector<2x8x8xf32> -> vector<2x8x8xf32>
    "tpu.trace_stop"() : () -> ()
    %64 = vector.shape_cast %63 : vector<2x8x8xf32> to vector<16x8xf32>
    %65 = arith.truncf %64 : vector<16x8xf32> to vector<16x8xbf16>
    %c0_33 = arith.constant 0 : index
    %c8 = arith.constant 8 : index
    %66 = vector.load %arg13[%c0_33, %c8] : memref<16x32xbf16, #tpu.memory_space<vmem>>, vector<16x8xbf16>
    tpu.vector_store %arg13[%c0_33, %c8], %65 {strides = array<i32>} : memref<16x32xbf16, #tpu.memory_space<vmem>>, vector<16x8xbf16>,
    %67 = vector.extract_strided_slice %24 {offsets = [0, 0, 16], sizes = [2, 8, 8], strides = [1, 1, 1]} : vector<2x8x32xbf16> to vector<2x8x8xbf16>
    %68 = vector.extract_strided_slice %26 {offsets = [0, 0, 16], sizes = [2, 8, 8], strides = [1, 1, 1]} : vector<2x8x32xbf16> to vector<2x8x8xbf16>
    %69 = vector.extract_strided_slice %28 {offsets = [0, 0, 16], sizes = [2, 8, 8], strides = [1, 1, 1]} : vector<2x8x32xbf16> to vector<2x8x8xbf16>
    "tpu.trace_start"() <{level = 10 : i32, message = "nqd,nkd->nqk"}> : () -> ()
    %cst_34 = arith.constant dense<0.000000e+00> : vector<2x8x8xf32>
    %70 = tpu.matmul %67, %68, %cst_34 {dimension_numbers = #tpu.dot_dimension_numbers<[2], [2], [1], [1], [0, 0, 0, 1, 1, 1], [0], [0]>} : vector<2x8x8xbf16>, vector<2x8x8xbf16>, vector<2x8x8xf32> -> vector<2x8x8xf32>
    "tpu.trace_stop"() : () -> ()
    %cst_35 = arith.constant dense<0xFF800000> : vector<2x8xf32>
    %71 = vector.multi_reduction <maximumf>, %70, %cst_35 [2] : vector<2x8x8xf32> to vector<2x8xf32>
    %72 = vector.shape_cast %71 : vector<2x8xf32> to vector<2x8x1xf32>
    %73 = vector.broadcast %72 : vector<2x8x1xf32> to vector<2x8x8xf32>
    %74 = arith.subf %70, %73 : vector<2x8x8xf32>
    %75 = math.exp %74 : vector<2x8x8xf32>
    %cst_36 = arith.constant dense<0.000000e+00> : vector<2x8xf32>
    %76 = vector.multi_reduction <add>, %75, %cst_36 [2] : vector<2x8x8xf32> to vector<2x8xf32>
    %77 = vector.shape_cast %76 : vector<2x8xf32> to vector<2x8x1xf32>
    %78 = tpu.reciprocal %77 {approx = true} : vector<2x8x1xf32> -> vector<2x8x1xf32>
    %79 = vector.broadcast %78 : vector<2x8x1xf32> to vector<2x8x8xf32>
    %80 = arith.mulf %75, %79 : vector<2x8x8xf32>
    %81 = arith.truncf %80 : vector<2x8x8xf32> to vector<2x8x8xbf16>
    "tpu.trace_start"() <{level = 10 : i32, message = "nqk,nkd->nqd"}> : () -> ()
    %cst_37 = arith.constant dense<0.000000e+00> : vector<2x8x8xf32>
    %82 = tpu.matmul %81, %69, %cst_37 {dimension_numbers = #tpu.dot_dimension_numbers<[2], [1], [1], [2], [0, 0, 0, 1, 1, 2], [0], [0]>} : vector<2x8x8xbf16>, vector<2x8x8xbf16>, vector<2x8x8xf32> -> vector<2x8x8xf32>
    "tpu.trace_stop"() : () -> ()
    %83 = vector.shape_cast %82 : vector<2x8x8xf32> to vector<16x8xf32>
    %84 = arith.truncf %83 : vector<16x8xf32> to vector<16x8xbf16>
    %c0_38 = arith.constant 0 : index
    %c16 = arith.constant 16 : index
    %85 = vector.load %arg13[%c0_38, %c16] : memref<16x32xbf16, #tpu.memory_space<vmem>>, vector<16x8xbf16>
    tpu.vector_store %arg13[%c0_38, %c16], %84 {strides = array<i32>} : memref<16x32xbf16, #tpu.memory_space<vmem>>, vector<16x8xbf16>,
    %86 = vector.extract_strided_slice %24 {offsets = [0, 0, 24], sizes = [2, 8, 8], strides = [1, 1, 1]} : vector<2x8x32xbf16> to vector<2x8x8xbf16>
    %87 = vector.extract_strided_slice %26 {offsets = [0, 0, 24], sizes = [2, 8, 8], strides = [1, 1, 1]} : vector<2x8x32xbf16> to vector<2x8x8xbf16>
    %88 = vector.extract_strided_slice %28 {offsets = [0, 0, 24], sizes = [2, 8, 8], strides = [1, 1, 1]} : vector<2x8x32xbf16> to vector<2x8x8xbf16>
    "tpu.trace_start"() <{level = 10 : i32, message = "nqd,nkd->nqk"}> : () -> ()
    %cst_39 = arith.constant dense<0.000000e+00> : vector<2x8x8xf32>
    %89 = tpu.matmul %86, %87, %cst_39 {dimension_numbers = #tpu.dot_dimension_numbers<[2], [2], [1], [1], [0, 0, 0, 1, 1, 1], [0], [0]>} : vector<2x8x8xbf16>, vector<2x8x8xbf16>, vector<2x8x8xf32> -> vector<2x8x8xf32>
    "tpu.trace_stop"() : () -> ()
    %cst_40 = arith.constant dense<0xFF800000> : vector<2x8xf32>
    %90 = vector.multi_reduction <maximumf>, %89, %cst_40 [2] : vector<2x8x8xf32> to vector<2x8xf32>
    %91 = vector.shape_cast %90 : vector<2x8xf32> to vector<2x8x1xf32>
    %92 = vector.broadcast %91 : vector<2x8x1xf32> to vector<2x8x8xf32>
    %93 = arith.subf %89, %92 : vector<2x8x8xf32>
    %94 = math.exp %93 : vector<2x8x8xf32>
    %cst_41 = arith.constant dense<0.000000e+00> : vector<2x8xf32>
    %95 = vector.multi_reduction <add>, %94, %cst_41 [2] : vector<2x8x8xf32> to vector<2x8xf32>
    %96 = vector.shape_cast %95 : vector<2x8xf32> to vector<2x8x1xf32>
    %97 = tpu.reciprocal %96 {approx = true} : vector<2x8x1xf32> -> vector<2x8x1xf32>
    %98 = vector.broadcast %97 : vector<2x8x1xf32> to vector<2x8x8xf32>
    %99 = arith.mulf %94, %98 : vector<2x8x8xf32>
    %100 = arith.truncf %99 : vector<2x8x8xf32> to vector<2x8x8xbf16>
    "tpu.trace_start"() <{level = 10 : i32, message = "nqk,nkd->nqd"}> : () -> ()
    %cst_42 = arith.constant dense<0.000000e+00> : vector<2x8x8xf32>
    %101 = tpu.matmul %100, %88, %cst_42 {dimension_numbers = #tpu.dot_dimension_numbers<[2], [1], [1], [2], [0, 0, 0, 1, 1, 2], [0], [0]>} : vector<2x8x8xbf16>, vector<2x8x8xbf16>, vector<2x8x8xf32> -> vector<2x8x8xf32>
    "tpu.trace_stop"() : () -> ()
    %102 = vector.shape_cast %101 : vector<2x8x8xf32> to vector<16x8xf32>
    %103 = arith.truncf %102 : vector<16x8xf32> to vector<16x8xbf16>
    %c0_43 = arith.constant 0 : index
    %c24 = arith.constant 24 : index
    %104 = vector.load %arg13[%c0_43, %c24] : memref<16x32xbf16, #tpu.memory_space<vmem>>, vector<16x8xbf16>
    tpu.vector_store %arg13[%c0_43, %c24], %103 {strides = array<i32>} : memref<16x32xbf16, #tpu.memory_space<vmem>>, vector<16x8xbf16>,
    %c0_44 = arith.constant 0 : index
    %c0_45 = arith.constant 0 : index
    %105 = vector.load %arg13[%c0_44, %c0_45] : memref<16x32xbf16, #tpu.memory_space<vmem>>, vector<16x32xbf16>
    %c0_46 = arith.constant 0 : index
    %c0_47 = arith.constant 0 : index
    %106 = vector.load %arg10[%c0_46, %c0_47] : memref<32x32xbf16, #tpu.memory_space<vmem>>, vector<32x32xbf16>
    %cst_48 = arith.constant dense<0.000000e+00> : vector<16x32xf32>
    %107 = tpu.matmul %105, %106, %cst_48 {dimension_numbers = #tpu.dot_dimension_numbers<[1], [0], [0], [1], [0, 0, 1, 1], [], []>} : vector<16x32xbf16>, vector<32x32xbf16>, vector<16x32xf32> -> vector<16x32xf32>
    %c0_49 = arith.constant 0 : index
    %c0_50 = arith.constant 0 : index
    %108 = vector.load %arg11[%c0_49, %c0_50] : memref<1x32xf32, #tpu.memory_space<vmem>>, vector<1x32xf32>
    %109 = vector.broadcast %108 : vector<1x32xf32> to vector<16x32xf32>
    %110 = arith.addf %107, %109 : vector<16x32xf32>
    %111 = vector.shape_cast %110 : vector<16x32xf32> to vector<2x8x32xf32>
    %c0_51 = arith.constant 0 : index
    %c0_52 = arith.constant 0 : index
    %c0_53 = arith.constant 0 : index
    %112 = vector.load %arg12[%c0_51, %c0_52, %c0_53] : memref<2x8x32xf32, #tpu.memory_space<vmem>>, vector<2x8x32xf32>
    tpu.vector_store %arg12[%c0_51, %c0_52, %c0_53], %111 {strides = array<i32>} : memref<2x8x32xf32, #tpu.memory_space<vmem>>, vector<2x8x32xf32>,
    return
  }
  func.func @transform_0(%arg0: i32) -> (i32, i32, i32) {
    %c0_i32 = arith.constant 0 : i32
    %c0_i32_0 = arith.constant 0 : i32
    %c0_i32_1 = arith.constant 0 : i32
    return %arg0, %c0_i32, %c0_i32_0 : i32, i32, i32
  }
  func.func @transform_1(%arg0: i32) -> (i32, i32, i32) {
    %c0_i32 = arith.constant 0 : i32
    %c0_i32_0 = arith.constant 0 : i32
    %c0_i32_1 = arith.constant 0 : i32
    return %arg0, %c0_i32, %c0_i32_0 : i32, i32, i32
  }
  func.func @transform_2(%arg0: i32) -> (i32, i32, i32) {
    %c0_i32 = arith.constant 0 : i32
    %c0_i32_0 = arith.constant 0 : i32
    %c0_i32_1 = arith.constant 0 : i32
    return %arg0, %c0_i32, %c0_i32_0 : i32, i32, i32
  }
  func.func @transform_3(%arg0: i32) -> (i32, i32) {
    %c0_i32 = arith.constant 0 : i32
    %c0_i32_0 = arith.constant 0 : i32
    %c0_i32_1 = arith.constant 0 : i32
    return %c0_i32, %c0_i32_0 : i32, i32
  }
  func.func @transform_4(%arg0: i32) -> (i32, i32) {
    %c0_i32 = arith.constant 0 : i32
    %c0_i32_0 = arith.constant 0 : i32
    %c0_i32_1 = arith.constant 0 : i32
    return %c0_i32, %c0_i32_0 : i32, i32
  }
  func.func @transform_5(%arg0: i32) -> (i32, i32) {
    %c0_i32 = arith.constant 0 : i32
    %c0_i32_0 = arith.constant 0 : i32
    %c0_i32_1 = arith.constant 0 : i32
    return %c0_i32, %c0_i32_0 : i32, i32
  }
  func.func @transform_6(%arg0: i32) -> (i32, i32) {
    %c0_i32 = arith.constant 0 : i32
    %c0_i32_0 = arith.constant 0 : i32
    %c0_i32_1 = arith.constant 0 : i32
    return %c0_i32, %c0_i32_0 : i32, i32
  }
  func.func @transform_7(%arg0: i32) -> (i32, i32) {
    %c0_i32 = arith.constant 0 : i32
    %c0_i32_0 = arith.constant 0 : i32
    %c0_i32_1 = arith.constant 0 : i32
    return %c0_i32, %c0_i32_0 : i32, i32
  }
  func.func @transform_8(%arg0: i32) -> (i32, i32) {
    %c0_i32 = arith.constant 0 : i32
    %c0_i32_0 = arith.constant 0 : i32
    %c0_i32_1 = arith.constant 0 : i32
    return %c0_i32, %c0_i32_0 : i32, i32
  }
  func.func @transform_9(%arg0: i32) -> (i32, i32) {
    %c0_i32 = arith.constant 0 : i32
    %c0_i32_0 = arith.constant 0 : i32
    %c0_i32_1 = arith.constant 0 : i32
    return %c0_i32, %c0_i32_0 : i32, i32
  }
  func.func @transform_10(%arg0: i32) -> (i32, i32) {
    %c0_i32 = arith.constant 0 : i32
    %c0_i32_0 = arith.constant 0 : i32
    %c0_i32_1 = arith.constant 0 : i32
    return %c0_i32, %c0_i32_0 : i32, i32
  }
  func.func @transform_11(%arg0: i32) -> (i32, i32, i32) {
    %c0_i32 = arith.constant 0 : i32
    %c0_i32_0 = arith.constant 0 : i32
    %c0_i32_1 = arith.constant 0 : i32
    return %arg0, %c0_i32, %c0_i32_0 : i32, i32, i32
  }
}

</mosaic_0001>

<llo_original>
// kernel: tpu_custom_call.1
$region0: #{tpu_custom_call.1}
  #allocation0 [shape = 'u32[]', space=smem, size = 0x4, offset = 0x4, fixed_abs, tag = 'smem constant byte address 0x4 - core index']
  #allocation1 [shape = 'u32[72,128]{1,0:T(1,128)}', space=vmem, size = 0x9000, scoped, tag = 'internal scratch']
  #allocation2 [shape = 'bf16[16,32]{1,0:T(8,128)(2,1)}', space=vmem, size = 0x1000, scoped, tag = 'scratch operand']
  %s0 = inlined_call_operand.hbm [shape: bf16[4,8,32], index: 0, kind: input, shape index: {}]
  %s1 = inlined_call_operand.hbm [shape: bf16[4,8,32], index: 1, kind: input, shape index: {}]
  %s2 = inlined_call_operand.hbm [shape: bf16[4,8,32], index: 2, kind: input, shape index: {}]
  %s3 = inlined_call_operand.hbm [shape: bf16[32,32], index: 3, kind: input, shape index: {}]
  %s4 = inlined_call_operand.vmem [shape: f32[1,32], index: 4, kind: input, shape index: {}]
  %s5 = inlined_call_operand.hbm [shape: bf16[32,32], index: 5, kind: input, shape index: {}]
  %s6 = inlined_call_operand.vmem [shape: f32[1,32], index: 6, kind: input, shape index: {}]
  %s7 = inlined_call_operand.hbm [shape: bf16[32,32], index: 7, kind: input, shape index: {}]
  %s8 = inlined_call_operand.vmem [shape: f32[1,32], index: 8, kind: input, shape index: {}]
  %s9 = inlined_call_operand.hbm [shape: bf16[32,32], index: 9, kind: input, shape index: {}]
  %s10 = inlined_call_operand.vmem [shape: f32[1,32], index: 10, kind: input, shape index: {}]
  %s11 = inlined_call_operand.hbm [shape: f32[4,8,32], index: 11, kind: output, shape index: {}]
  %s12 = sld [smem:[#allocation0]]
  $region105: #{tpu_custom_call.1} parent=0
    _
  %s14 = ssub.s32 1, %s12
  %s15 = scalar_select 0, %s14, %s12
  $region1: #{tpu_custom_call.1} parent=0
    #allocation3 [shape = 'u8[8192]{0}', space=vmem, size = 0x2000, scoped, tag = 'input window, operand 0']
    #allocation4 [shape = 's32[2]{0}', space=sflag, size = 0x8, scoped, tag = 'scoped memory for tpu_custom_call.1']
    #allocation5 [shape = 's32[2]{0}', space=sflag, size = 0x8, scoped, tag = 'scoped memory for tpu_custom_call.1']
    #allocation6 [shape = 'u8[8192]{0}', space=vmem, size = 0x2000, scoped, tag = 'input window, operand 1']
    #allocation7 [shape = 's32[2]{0}', space=sflag, size = 0x8, scoped, tag = 'scoped memory for tpu_custom_call.1']
    #allocation8 [shape = 'u8[8192]{0}', space=vmem, size = 0x2000, scoped, tag = 'input window, operand 2']
    #allocation9 [shape = 'u8[8192]{0}', space=vmem, size = 0x2000, scoped, tag = 'input window, operand 3, single buffered']
    #allocation10 [shape = 's32[1]{0}', space=sflag, size = 0x4, scoped, tag = 'scoped memory for tpu_custom_call.1']
    #allocation11 [shape = 'u8[8192]{0}', space=vmem, size = 0x2000, scoped, tag = 'input window, operand 5, single buffered']
    #allocation12 [shape = 'u8[8192]{0}', space=vmem, size = 0x2000, scoped, tag = 'input window, operand 7, single buffered']
    #allocation13 [shape = 's32[1]{0}', space=sflag, size = 0x4, scoped, tag = 'scoped memory for tpu_custom_call.1']
    #allocation14 [shape = 'u8[8192]{0}', space=vmem, size = 0x2000, scoped, tag = 'input window, operand 9, single buffered']
    #allocation15 [shape = 'u8[16384]{0}', space=vmem, size = 0x4000, scoped, tag = 'output window, operand 0']
    %16 = vsyncpa [#allocation4], 0
    %s17 = scalar_lea.sflag [#allocation4], 1
    %18 = vsyncpa %s17, 0
    %19 = vsyncpa [#allocation7], 0
    %s20 = scalar_lea.sflag [#allocation7], 1
    %21 = vsyncpa %s20, 0
    %22 = vsyncpa [#allocation10], 0
    %23 = vsyncpa [#allocation13], 0
    %24 = vsyncpa [#allocation5], 0
    %s25 = scalar_lea.sflag [#allocation5], 1
    %26 = vsyncpa %s25, 0
    loop: start=0, step=1, limit=4
    $region2: #{tpu_custom_call.1} parent=1 // loop_pre_header
      _
    $region3: #{tpu_custom_call.1} parent=1 // loop_header
      %s28 = sphi 0, %s32
      %p29 = scmp.ge.s32.totalorder %s28, 4
      %s38 = sphi 0, %s40
      %s41 = sphi 0, %s38
      %s42 = sphi 0, %s41
      %s58 = sphi 0, %s42
      %s64 = sphi 0, %s66
      %s67 = sphi 0, %s64
      %s68 = sphi 0, %s67
      %s84 = sphi 0, %s68
      %s90 = sphi 0, %s92
      %s93 = sphi 0, %s90
      %s94 = sphi 0, %s93
      %s110 = sphi 0, %s94
      %s114 = sphi 0, %s114
      %s116 = sphi 0, %s114
      %s117 = sphi 0, %s116
      %s131 = sphi 0, %s117
      %s135 = sphi 0, %s135
      %s137 = sphi 0, %s135
      %s138 = sphi 0, %s137
      %s152 = sphi 0, %s138
      %s156 = sphi 0, %s156
      %s158 = sphi 0, %s156
      %s159 = sphi 0, %s158
      %s173 = sphi 0, %s159
      %s177 = sphi 0, %s177
      %s179 = sphi 0, %s177
      %s180 = sphi 0, %s179
      %s194 = sphi 0, %s180
      %s198 = sphi 0, %s198
      %s200 = sphi 0, %s198
      %s201 = sphi 0, %s200
      %s215 = sphi 0, %s201
      %s219 = sphi 0, %s219
      %s221 = sphi 0, %s219
      %s222 = sphi 0, %s221
      %s236 = sphi 0, %s222
      %s240 = sphi 0, %s240
      %s242 = sphi 0, %s240
      %s243 = sphi 0, %s242
      %s257 = sphi 0, %s243
      %s261 = sphi 0, %s261
      %s263 = sphi 0, %s261
      %s264 = sphi 0, %s263
      %s278 = sphi 0, %s264
      %s284 = sphi 0, %s286
      %s287 = sphi 0, %s284
      %s288 = sphi 0, %s287
      %s304 = sphi 0, %s288
    $region4: #{tpu_custom_call.1} parent=1 // loop_header_branch
      %31 = sbr.rel (%p29) target = $region8
    $region5: #{tpu_custom_call.1} parent=1 // loop_body
      %s33 = ssub.s32 %s28, 1
      %s34 = ssub.s32 %s28, 2
      %s35 = sadd.s32 %s28, 1
      %s36 = ssub.s32 %s28, %s35
      %p37 = scmp.eq.s32.totalorder %s36, 0
      %s39 = sadd.s32 %s38, 1
      %s40 = scalar_select %p37, %s38, %s39
      %p43 = pneg %p37
      %p44 = scmp.eq.s32.totalorder %s28, 1
      %p45 = por %p43, %p44
      %p46 = scmp.ne.s32.totalorder %s38, %s41
      %p47 = scmp.eq.s32.totalorder %s28, 0
      %p48 = por %p46, %p47
      %p49 = scmp.ne.s32.totalorder %s38, %s41
      %p50 = scmp.eq.s32.totalorder %s33, 1
      %p51 = por %p49, %p50
      %p52 = scmp.ne.s32.totalorder %s41, %s42
      %p53 = scmp.eq.s32.totalorder %s33, 0
      %p54 = por %p52, %p53
      %p55 = scmp.ne.s32.totalorder %s41, %s42
      %p56 = scmp.eq.s32.totalorder %s34, 1
      %p57 = por %p55, %p56
      %p59 = scmp.ne.s32.totalorder %s42, %s58
      %p60 = scmp.eq.s32.totalorder %s34, 0
      %p61 = por %p59, %p60
      %s62 = ssub.s32 %s28, %s35
      %p63 = scmp.eq.s32.totalorder %s62, 0
      %s65 = sadd.s32 %s64, 1
      %s66 = scalar_select %p63, %s64, %s65
      %p69 = pneg %p63
      %p70 = scmp.eq.s32.totalorder %s28, 1
      %p71 = por %p69, %p70
      %p72 = scmp.ne.s32.totalorder %s64, %s67
      %p73 = scmp.eq.s32.totalorder %s28, 0
      %p74 = por %p72, %p73
      %p75 = scmp.ne.s32.totalorder %s64, %s67
      %p76 = scmp.eq.s32.totalorder %s33, 1
      %p77 = por %p75, %p76
      %p78 = scmp.ne.s32.totalorder %s67, %s68
      %p79 = scmp.eq.s32.totalorder %s33, 0
      %p80 = por %p78, %p79
      %p81 = scmp.ne.s32.totalorder %s67, %s68
      %p82 = scmp.eq.s32.totalorder %s34, 1
      %p83 = por %p81, %p82
      %p85 = scmp.ne.s32.totalorder %s68, %s84
      %p86 = scmp.eq.s32.totalorder %s34, 0
      %p87 = por %p85, %p86
      %s88 = ssub.s32 %s28, %s35
      %p89 = scmp.eq.s32.totalorder %s88, 0
      %s91 = sadd.s32 %s90, 1
      %s92 = scalar_select %p89, %s90, %s91
      %p95 = pneg %p89
      %p96 = scmp.eq.s32.totalorder %s28, 1
      %p97 = por %p95, %p96
      %p98 = scmp.ne.s32.totalorder %s90, %s93
      %p99 = scmp.eq.s32.totalorder %s28, 0
      %p100 = por %p98, %p99
      %p101 = scmp.ne.s32.totalorder %s90, %s93
      %p102 = scmp.eq.s32.totalorder %s33, 1
      %p103 = por %p101, %p102
      %p104 = scmp.ne.s32.totalorder %s93, %s94
      %p105 = scmp.eq.s32.totalorder %s33, 0
      %p106 = por %p104, %p105
      %p107 = scmp.ne.s32.totalorder %s93, %s94
      %p108 = scmp.eq.s32.totalorder %s34, 1
      %p109 = por %p107, %p108
      %p111 = scmp.ne.s32.totalorder %s94, %s110
      %p112 = scmp.eq.s32.totalorder %s34, 0
      %p113 = por %p111, %p112
      %s115 = sadd.s32 %s114, 1
      %p118 = scmp.eq.s32.totalorder %s28, 1
      %p119 = scmp.ne.s32.totalorder %s114, %s116
      %p120 = scmp.eq.s32.totalorder %s28, 0
      %p121 = por %p119, %p120
      %p122 = scmp.ne.s32.totalorder %s114, %s116
      %p123 = scmp.eq.s32.totalorder %s33, 1
      %p124 = por %p122, %p123
      %p125 = scmp.ne.s32.totalorder %s116, %s117
      %p126 = scmp.eq.s32.totalorder %s33, 0
      %p127 = por %p125, %p126
      %p128 = scmp.ne.s32.totalorder %s116, %s117
      %p129 = scmp.eq.s32.totalorder %s34, 1
      %p130 = por %p128, %p129
      %p132 = scmp.ne.s32.totalorder %s117, %s131
      %p133 = scmp.eq.s32.totalorder %s34, 0
      %p134 = por %p132, %p133
      %s136 = sadd.s32 %s135, 1
      %p139 = scmp.eq.s32.totalorder %s28, 1
      %p140 = scmp.ne.s32.totalorder %s135, %s137
      %p141 = scmp.eq.s32.totalorder %s28, 0
      %p142 = por %p140, %p141
      %p143 = scmp.ne.s32.totalorder %s135, %s137
      %p144 = scmp.eq.s32.totalorder %s33, 1
      %p145 = por %p143, %p144
      %p146 = scmp.ne.s32.totalorder %s137, %s138
      %p147 = scmp.eq.s32.totalorder %s33, 0
      %p148 = por %p146, %p147
      %p149 = scmp.ne.s32.totalorder %s137, %s138
      %p150 = scmp.eq.s32.totalorder %s34, 1
      %p151 = por %p149, %p150
      %p153 = scmp.ne.s32.totalorder %s138, %s152
      %p154 = scmp.eq.s32.totalorder %s34, 0
      %p155 = por %p153, %p154
      %s157 = sadd.s32 %s156, 1
      %p160 = scmp.eq.s32.totalorder %s28, 1
      %p161 = scmp.ne.s32.totalorder %s156, %s158
      %p162 = scmp.eq.s32.totalorder %s28, 0
      %p163 = por %p161, %p162
      %p164 = scmp.ne.s32.totalorder %s156, %s158
      %p165 = scmp.eq.s32.totalorder %s33, 1
      %p166 = por %p164, %p165
      %p167 = scmp.ne.s32.totalorder %s158, %s159
      %p168 = scmp.eq.s32.totalorder %s33, 0
      %p169 = por %p167, %p168
      %p170 = scmp.ne.s32.totalorder %s158, %s159
      %p171 = scmp.eq.s32.totalorder %s34, 1
      %p172 = por %p170, %p171
      %p174 = scmp.ne.s32.totalorder %s159, %s173
      %p175 = scmp.eq.s32.totalorder %s34, 0
      %p176 = por %p174, %p175
      %s178 = sadd.s32 %s177, 1
      %p181 = scmp.eq.s32.totalorder %s28, 1
      %p182 = scmp.ne.s32.totalorder %s177, %s179
      %p183 = scmp.eq.s32.totalorder %s28, 0
      %p184 = por %p182, %p183
      %p185 = scmp.ne.s32.totalorder %s177, %s179
      %p186 = scmp.eq.s32.totalorder %s33, 1
      %p187 = por %p185, %p186
      %p188 = scmp.ne.s32.totalorder %s179, %s180
      %p189 = scmp.eq.s32.totalorder %s33, 0
      %p190 = por %p188, %p189
      %p191 = scmp.ne.s32.totalorder %s179, %s180
      %p192 = scmp.eq.s32.totalorder %s34, 1
      %p193 = por %p191, %p192
      %p195 = scmp.ne.s32.totalorder %s180, %s194
      %p196 = scmp.eq.s32.totalorder %s34, 0
      %p197 = por %p195, %p196
      %s199 = sadd.s32 %s198, 1
      %p202 = scmp.eq.s32.totalorder %s28, 1
      %p203 = scmp.ne.s32.totalorder %s198, %s200
      %p204 = scmp.eq.s32.totalorder %s28, 0
      %p205 = por %p203, %p204
      %p206 = scmp.ne.s32.totalorder %s198, %s200
      %p207 = scmp.eq.s32.totalorder %s33, 1
      %p208 = por %p206, %p207
      %p209 = scmp.ne.s32.totalorder %s200, %s201
      %p210 = scmp.eq.s32.totalorder %s33, 0
      %p211 = por %p209, %p210
      %p212 = scmp.ne.s32.totalorder %s200, %s201
      %p213 = scmp.eq.s32.totalorder %s34, 1
      %p214 = por %p212, %p213
      %p216 = scmp.ne.s32.totalorder %s201, %s215
      %p217 = scmp.eq.s32.totalorder %s34, 0
      %p218 = por %p216, %p217
      %s220 = sadd.s32 %s219, 1
      %p223 = scmp.eq.s32.totalorder %s28, 1
      %p224 = scmp.ne.s32.totalorder %s219, %s221
      %p225 = scmp.eq.s32.totalorder %s28, 0
      %p226 = por %p224, %p225
      %p227 = scmp.ne.s32.totalorder %s219, %s221
      %p228 = scmp.eq.s32.totalorder %s33, 1
      %p229 = por %p227, %p228
      %p230 = scmp.ne.s32.totalorder %s221, %s222
      %p231 = scmp.eq.s32.totalorder %s33, 0
      %p232 = por %p230, %p231
      %p233 = scmp.ne.s32.totalorder %s221, %s222
      %p234 = scmp.eq.s32.totalorder %s34, 1
      %p235 = por %p233, %p234
      %p237 = scmp.ne.s32.totalorder %s222, %s236
      %p238 = scmp.eq.s32.totalorder %s34, 0
      %p239 = por %p237, %p238
      %s241 = sadd.s32 %s240, 1
      %p244 = scmp.eq.s32.totalorder %s28, 1
      %p245 = scmp.ne.s32.totalorder %s240, %s242
      %p246 = scmp.eq.s32.totalorder %s28, 0
      %p247 = por %p245, %p246
      %p248 = scmp.ne.s32.totalorder %s240, %s242
      %p249 = scmp.eq.s32.totalorder %s33, 1
      %p250 = por %p248, %p249
      %p251 = scmp.ne.s32.totalorder %s242, %s243
      %p252 = scmp.eq.s32.totalorder %s33, 0
      %p253 = por %p251, %p252
      %p254 = scmp.ne.s32.totalorder %s242, %s243
      %p255 = scmp.eq.s32.totalorder %s34, 1
      %p256 = por %p254, %p255
      %p258 = scmp.ne.s32.totalorder %s243, %s257
      %p259 = scmp.eq.s32.totalorder %s34, 0
      %p260 = por %p258, %p259
      %s262 = sadd.s32 %s261, 1
      %p265 = scmp.eq.s32.totalorder %s28, 1
      %p266 = scmp.ne.s32.totalorder %s261, %s263
      %p267 = scmp.eq.s32.totalorder %s28, 0
      %p268 = por %p266, %p267
      %p269 = scmp.ne.s32.totalorder %s261, %s263
      %p270 = scmp.eq.s32.totalorder %s33, 1
      %p271 = por %p269, %p270
      %p272 = scmp.ne.s32.totalorder %s263, %s264
      %p273 = scmp.eq.s32.totalorder %s33, 0
      %p274 = por %p272, %p273
      %p275 = scmp.ne.s32.totalorder %s263, %s264
      %p276 = scmp.eq.s32.totalorder %s34, 1
      %p277 = por %p275, %p276
      %p279 = scmp.ne.s32.totalorder %s264, %s278
      %p280 = scmp.eq.s32.totalorder %s34, 0
      %p281 = por %p279, %p280
      %s282 = ssub.s32 %s28, %s35
      %p283 = scmp.eq.s32.totalorder %s282, 0
      %s285 = sadd.s32 %s284, 1
      %s286 = scalar_select %p283, %s284, %s285
      %p289 = pneg %p283
      %p290 = scmp.eq.s32.totalorder %s28, 1
      %p291 = por %p289, %p290
      %p292 = scmp.ne.s32.totalorder %s284, %s287
      %p293 = scmp.eq.s32.totalorder %s28, 0
      %p294 = por %p292, %p293
      %p295 = scmp.ne.s32.totalorder %s284, %s287
      %p296 = scmp.eq.s32.totalorder %s33, 1
      %p297 = por %p295, %p296
      %p298 = scmp.ne.s32.totalorder %s287, %s288
      %p299 = scmp.eq.s32.totalorder %s33, 0
      %p300 = por %p298, %p299
      %p301 = scmp.ne.s32.totalorder %s287, %s288
      %p302 = scmp.eq.s32.totalorder %s34, 1
      %p303 = por %p301, %p302
      %p305 = scmp.ne.s32.totalorder %s288, %s304
      %p306 = scmp.eq.s32.totalorder %s34, 0
      %p307 = por %p305, %p306
      %p308 = scmp.le.s32.totalorder 1, %s28
      %p309 = scmp.lt.s32.totalorder %s28, 3
      %p310 = pnand %p308, %p309
      %p311 = pneg %p310
      // Predicated region
      $region9: #{tpu_custom_call.1} parent=5 // pred_check
        _
      $region10: #{tpu_custom_call.1} parent=5 // pred_check_branch
        %313 = sbr.rel (%p310) target = $region12
      $region11: #{tpu_custom_call.1} parent=5 // pred_region
        %s314 = ssub.s32 %s28, 1
        // Predicated region
        $region13: #{tpu_custom_call.1} parent=11 // pred_check
          %p315 = pneg %p127
        $region14: #{tpu_custom_call.1} parent=11 // pred_check_branch
          %317 = sbr.rel (%p315) target = $region16
        $region15: #{tpu_custom_call.1} parent=11 // pred_region
          %319 = vsyncadd [#allocation10], 0
          %s320 = sshll.u32 %s3, 4
          %s321 = int_to_ptr.hbm [resolvable:$true] %s320
          %s322 = sshll.u32 [#allocation9], 4
          %s323 = int_to_ptr.vmem [resolvable:$true] %s322
          %328 = dma.hbm_to_vmem [thread:$0]  %s321, 256, %s323, [#allocation10], 64, 64, 4
        $region16: #{tpu_custom_call.1} parent=11 // pred_fallthru
          _
        // Predicated region
        $region17: #{tpu_custom_call.1} parent=11 // pred_check
          %p329 = pneg %p148
        $region18: #{tpu_custom_call.1} parent=11 // pred_check_branch
          %331 = sbr.rel (%p329) target = $region20
        $region19: #{tpu_custom_call.1} parent=11 // pred_region
          _
        $region20: #{tpu_custom_call.1} parent=11 // pred_fallthru
          _
        // Predicated region
        $region21: #{tpu_custom_call.1} parent=11 // pred_check
          %p332 = pneg %p169
        $region22: #{tpu_custom_call.1} parent=11 // pred_check_branch
          %334 = sbr.rel (%p332) target = $region24
        $region23: #{tpu_custom_call.1} parent=11 // pred_region
          %336 = vsyncadd [#allocation10], 0
          %s337 = sshll.u32 %s5, 4
          %s338 = int_to_ptr.hbm [resolvable:$true] %s337
          %s339 = sshll.u32 [#allocation11], 4
          %s340 = int_to_ptr.vmem [resolvable:$true] %s339
          %345 = dma.hbm_to_vmem [thread:$0]  %s338, 256, %s340, [#allocation10], 64, 64, 4
        $region24: #{tpu_custom_call.1} parent=11 // pred_fallthru
          _
        // Predicated region
        $region25: #{tpu_custom_call.1} parent=11 // pred_check
          %p346 = pneg %p190
        $region26: #{tpu_custom_call.1} parent=11 // pred_check_branch
          %348 = sbr.rel (%p346) target = $region28
        $region27: #{tpu_custom_call.1} parent=11 // pred_region
          _
        $region28: #{tpu_custom_call.1} parent=11 // pred_fallthru
          _
        // Predicated region
        $region29: #{tpu_custom_call.1} parent=11 // pred_check
          %p349 = pneg %p211
        $region30: #{tpu_custom_call.1} parent=11 // pred_check_branch
          %351 = sbr.rel (%p349) target = $region32
        $region31: #{tpu_custom_call.1} parent=11 // pred_region
          %353 = vsyncadd [#allocation13], 0
          %s354 = sshll.u32 %s7, 4
          %s355 = int_to_ptr.hbm [resolvable:$true] %s354
          %s356 = sshll.u32 [#allocation12], 4
          %s357 = int_to_ptr.vmem [resolvable:$true] %s356
          %362 = dma.hbm_to_vmem [thread:$0]  %s355, 256, %s357, [#allocation13], 64, 64, 4
        $region32: #{tpu_custom_call.1} parent=11 // pred_fallthru
          _
        // Predicated region
        $region33: #{tpu_custom_call.1} parent=11 // pred_check
          %p363 = pneg %p232
        $region34: #{tpu_custom_call.1} parent=11 // pred_check_branch
          %365 = sbr.rel (%p363) target = $region36
        $region35: #{tpu_custom_call.1} parent=11 // pred_region
          _
        $region36: #{tpu_custom_call.1} parent=11 // pred_fallthru
          _
        // Predicated region
        $region37: #{tpu_custom_call.1} parent=11 // pred_check
          %p366 = pneg %p253
        $region38: #{tpu_custom_call.1} parent=11 // pred_check_branch
          %368 = sbr.rel (%p366) target = $region40
        $region39: #{tpu_custom_call.1} parent=11 // pred_region
          %370 = vsyncadd [#allocation13], 0
          %s371 = sshll.u32 %s9, 4
          %s372 = int_to_ptr.hbm [resolvable:$true] %s371
          %s373 = sshll.u32 [#allocation14], 4
          %s374 = int_to_ptr.vmem [resolvable:$true] %s373
          %379 = dma.hbm_to_vmem [thread:$0]  %s372, 256, %s374, [#allocation13], 64, 64, 4
        $region40: #{tpu_custom_call.1} parent=11 // pred_fallthru
          _
        // Predicated region
        $region41: #{tpu_custom_call.1} parent=11 // pred_check
          %p380 = pneg %p274
        $region42: #{tpu_custom_call.1} parent=11 // pred_check_branch
          %382 = sbr.rel (%p380) target = $region44
        $region43: #{tpu_custom_call.1} parent=11 // pred_region
          _
        $region44: #{tpu_custom_call.1} parent=11 // pred_fallthru
          _
      $region12: #{tpu_custom_call.1} parent=5 // pred_fallthru
        _
      %p383 = scmp.lt.s32.totalorder %s28, 2
      // Predicated region
      $region45: #{tpu_custom_call.1} parent=5 // pred_check
        %p384 = pneg %p383
      $region46: #{tpu_custom_call.1} parent=5 // pred_check_branch
        %386 = sbr.rel (%p384) target = $region48
      $region47: #{tpu_custom_call.1} parent=5 // pred_region
        // Predicated region
        $region49: #{tpu_custom_call.1} parent=47 // pred_check
          %p387 = pneg %p48
        $region50: #{tpu_custom_call.1} parent=47 // pred_check_branch
          %389 = sbr.rel (%p387) target = $region52
        $region51: #{tpu_custom_call.1} parent=47 // pred_region
          %s390 = sand.u32 %s38, 1
          %s391 = scalar_lea.sflag [#allocation4], %s390
          %s392 = sand.u32 %s38, 1
          %s393 = smul.addr %s392, 8
          %s394 = scalar_lea.vmem [#allocation3], %s393
          %s395 = smul.u32 2, %s28
          %397 = vsyncadd %s391, 0
          %s398 = smul.addr %s395, 4
          %s399 = scalar_lea.hbm %s0, %s398
          %s400 = sshll.u32 %s399, 4
          %s401 = int_to_ptr.hbm [resolvable:$true] %s400
          %s402 = sshll.u32 %s394, 4
          %s403 = int_to_ptr.vmem [resolvable:$true] %s402
          %408 = dma.hbm_to_vmem [thread:$0]  %s401, 128, %s403, %s391, 64, 64, 4
        $region52: #{tpu_custom_call.1} parent=47 // pred_fallthru
          _
        // Predicated region
        $region53: #{tpu_custom_call.1} parent=47 // pred_check
          %p409 = pneg %p74
        $region54: #{tpu_custom_call.1} parent=47 // pred_check_branch
          %411 = sbr.rel (%p409) target = $region56
        $region55: #{tpu_custom_call.1} parent=47 // pred_region
          %s412 = sand.u32 %s28, 1
          %s413 = scalar_lea.sflag [#allocation7], %s412
          %s414 = sand.u32 %s64, 1
          %s415 = smul.addr %s414, 8
          %s416 = scalar_lea.vmem [#allocation6], %s415
          %s417 = smul.u32 2, %s28
          %419 = vsyncadd %s413, 0
          %s420 = smul.addr %s417, 4
          %s421 = scalar_lea.hbm %s1, %s420
          %s422 = sshll.u32 %s421, 4
          %s423 = int_to_ptr.hbm [resolvable:$true] %s422
          %s424 = sshll.u32 %s416, 4
          %s425 = int_to_ptr.vmem [resolvable:$true] %s424
          %430 = dma.hbm_to_vmem [thread:$0]  %s423, 128, %s425, %s413, 64, 64, 4
        $region56: #{tpu_custom_call.1} parent=47 // pred_fallthru
          _
        // Predicated region
        $region57: #{tpu_custom_call.1} parent=47 // pred_check
          %p431 = pneg %p100
        $region58: #{tpu_custom_call.1} parent=47 // pred_check_branch
          %433 = sbr.rel (%p431) target = $region60
        $region59: #{tpu_custom_call.1} parent=47 // pred_region
          %s434 = sand.u32 %s28, 1
          %s435 = scalar_lea.sflag [#allocation7], %s434
          %s436 = sand.u32 %s90, 1
          %s437 = smul.addr %s436, 8
          %s438 = scalar_lea.vmem [#allocation8], %s437
          %s439 = smul.u32 2, %s28
          %441 = vsyncadd %s435, 0
          %s442 = smul.addr %s439, 4
          %s443 = scalar_lea.hbm %s2, %s442
          %s444 = sshll.u32 %s443, 4
          %s445 = int_to_ptr.hbm [resolvable:$true] %s444
          %s446 = sshll.u32 %s438, 4
          %s447 = int_to_ptr.vmem [resolvable:$true] %s446
          %452 = dma.hbm_to_vmem [thread:$0]  %s445, 128, %s447, %s435, 64, 64, 4
        $region60: #{tpu_custom_call.1} parent=47 // pred_fallthru
          _
      $region48: #{tpu_custom_call.1} parent=5 // pred_fallthru
        _
      %p453 = scmp.le.s32.totalorder 1, %s28
      %p454 = scmp.lt.s32.totalorder %s28, 3
      %p455 = pnand %p453, %p454
      %p456 = pneg %p455
      // Predicated region
      $region61: #{tpu_custom_call.1} parent=5 // pred_check
        _
      $region62: #{tpu_custom_call.1} parent=5 // pred_check_branch
        %458 = sbr.rel (%p455) target = $region64
      $region63: #{tpu_custom_call.1} parent=5 // pred_region
        %s459 = ssub.s32 %s28, 1
        %s460 = sand.u32 %s41, 1
        %s461 = scalar_lea.sflag [#allocation4], %s460
        %s462 = sand.u32 %s41, 1
        %s463 = smul.addr %s462, 8
        %s464 = scalar_lea.vmem [#allocation3], %s463
        // Predicated region
        $region65: #{tpu_custom_call.1} parent=63 // pred_check
          %p465 = pneg %p54
        $region66: #{tpu_custom_call.1} parent=63 // pred_check_branch
          %467 = sbr.rel (%p465) target = $region68
        $region67: #{tpu_custom_call.1} parent=63 // pred_region
          %469 = dma.done %s461, 128
        $region68: #{tpu_custom_call.1} parent=63 // pred_fallthru
          _
        %s470 = sand.u32 %s33, 1
        %s471 = scalar_lea.sflag [#allocation7], %s470
        %s472 = sand.u32 %s67, 1
        %s473 = smul.addr %s472, 8
        %s474 = scalar_lea.vmem [#allocation6], %s473
        // Predicated region
        $region69: #{tpu_custom_call.1} parent=63 // pred_check
          %p475 = pneg %p80
        $region70: #{tpu_custom_call.1} parent=63 // pred_check_branch
          %477 = sbr.rel (%p475) target = $region72
        $region71: #{tpu_custom_call.1} parent=63 // pred_region
          %479 = dma.done %s471, 128
        $region72: #{tpu_custom_call.1} parent=63 // pred_fallthru
          _
        %s480 = sand.u32 %s33, 1
        %s481 = scalar_lea.sflag [#allocation7], %s480
        %s482 = sand.u32 %s93, 1
        %s483 = smul.addr %s482, 8
        %s484 = scalar_lea.vmem [#allocation8], %s483
        // Predicated region
        $region73: #{tpu_custom_call.1} parent=63 // pred_check
          %p485 = pneg %p106
        $region74: #{tpu_custom_call.1} parent=63 // pred_check_branch
          %487 = sbr.rel (%p485) target = $region76
        $region75: #{tpu_custom_call.1} parent=63 // pred_region
          %489 = dma.done %s481, 128
        $region76: #{tpu_custom_call.1} parent=63 // pred_fallthru
          _
        // Predicated region
        $region77: #{tpu_custom_call.1} parent=63 // pred_check
          %p490 = pneg %p127
        $region78: #{tpu_custom_call.1} parent=63 // pred_check_branch
          %492 = sbr.rel (%p490) target = $region80
        $region79: #{tpu_custom_call.1} parent=63 // pred_region
          %494 = dma.done [#allocation10], 256
        $region80: #{tpu_custom_call.1} parent=63 // pred_fallthru
          _
        // Predicated region
        $region81: #{tpu_custom_call.1} parent=63 // pred_check
          %p495 = pneg %p169
        $region82: #{tpu_custom_call.1} parent=63 // pred_check_branch
          %497 = sbr.rel (%p495) target = $region84
        $region83: #{tpu_custom_call.1} parent=63 // pred_region
          %499 = dma.done [#allocation10], 256
        $region84: #{tpu_custom_call.1} parent=63 // pred_fallthru
          _
        // Predicated region
        $region85: #{tpu_custom_call.1} parent=63 // pred_check
          %p500 = pneg %p211
        $region86: #{tpu_custom_call.1} parent=63 // pred_check_branch
          %502 = sbr.rel (%p500) target = $region88
        $region87: #{tpu_custom_call.1} parent=63 // pred_region
          %504 = dma.done [#allocation13], 256
        $region88: #{tpu_custom_call.1} parent=63 // pred_fallthru
          _
        // Predicated region
        $region89: #{tpu_custom_call.1} parent=63 // pred_check
          %p505 = pneg %p253
        $region90: #{tpu_custom_call.1} parent=63 // pred_check_branch
          %507 = sbr.rel (%p505) target = $region92
        $region91: #{tpu_custom_call.1} parent=63 // pred_region
          %509 = dma.done [#allocation13], 256
        $region92: #{tpu_custom_call.1} parent=63 // pred_fallthru
          _
        %s510 = sand.u32 %s41, 1
        %s511 = scalar_lea.sflag [#allocation4], %s510
        %s512 = sand.u32 %s41, 1
        %s513 = smul.addr %s512, 8
        %s514 = scalar_lea.vmem [#allocation3], %s513
        %p515 = pneg %p54
        %p516 = pneg %p51
        %s517 = sand.u32 %s33, 1
        %s518 = scalar_lea.sflag [#allocation7], %s517
        %s519 = sand.u32 %s67, 1
        %s520 = smul.addr %s519, 8
        %s521 = scalar_lea.vmem [#allocation6], %s520
        %p522 = pneg %p80
        %p523 = pneg %p77
        %s524 = sand.u32 %s33, 1
        %s525 = scalar_lea.sflag [#allocation7], %s524
        %s526 = sand.u32 %s93, 1
        %s527 = smul.addr %s526, 8
        %s528 = scalar_lea.vmem [#allocation8], %s527
        %p529 = pneg %p106
        %p530 = pneg %p103
        %p531 = pneg %p127
        %p532 = pneg %p124
        %p533 = pneg %p148
        %p534 = pneg %p145
        %p535 = pneg %p169
        %p536 = pneg %p166
        %p537 = pneg %p190
        %p538 = pneg %p187
        %p539 = pneg %p211
        %p540 = pneg %p208
        %p541 = pneg %p232
        %p542 = pneg %p229
        %p543 = pneg %p253
        %p544 = pneg %p250
        %p545 = pneg %p274
        %p546 = pneg %p271
        %p547 = pneg %p300
        %p548 = pneg %p297
        %s549 = sand.u32 %s287, 1
        %s550 = scalar_lea.sflag [#allocation5], %s549
        %s551 = sand.u32 %s287, 1
        %s552 = smul.addr %s551, 16
        %s553 = scalar_lea.vmem [#allocation15], %s552
        %s554 = smul.u32 2, %s33
        %s555 = smul.u32 2, %s33
        %s556 = smul.u32 2, %s33
        %s557 = smul.u32 2, %s33
        %v559 = vld [vmem:[%s464] sm:$0xf]
        %v560 = vld [vmem:[%s464 + $0x4] sm:$0xf]
        %v561 = vld [vmem:[%s474] sm:$0xf]
        %v562 = vld [vmem:[%s474 + $0x4] sm:$0xf]
        %v563 = vld [vmem:[%s484] sm:$0xf]
        %v564 = vld [vmem:[%s484 + $0x4] sm:$0xf]
        %v565 = vld [vmem:[#allocation9] sm:$0xf]
        %v566 = vld [vmem:[#allocation9 + $0x4] sm:$0xf]
        %v567 = vld [vmem:[#allocation9 + $0x8] sm:$0xf]
        %v568 = vld [vmem:[#allocation9 + $0xc] sm:$0xf]
        %v569 = vld [vmem:[%s4] sm:$0x1]
        %v571 = vperm.slane %v569, 0
        %v575 = vunpack.c.l.b16 %v559
        %v576 = vunpack.c.l.b16 %v560
        %v577 = vpack.c.b16 %v576, %v575
        %v582 = vunpack.c.l.b16 %v565
        %v583 = vunpack.c.l.b16 %v566
        %v584 = vunpack.c.l.b16 %v567
        %v585 = vunpack.c.l.b16 %v568
        %v586 = vpack.c.b16 %v583, %v582
        %v587 = vpack.c.b16 %v585, %v584
        %vm590 = vcmask 261120
        %v592 = vsel %vm590, %v577, 0
        %594 = vmatpush.bf16.msra.mxu0 0
        %595 = vmatpush.bf16.msra.mxu0 0
        %596 = vmatpush.bf16.msra.mxu0 0
        %597 = vmatpush.bf16.msra.mxu0 0
        %598 = vmatpush.bf16.msra.mxu0 0
        %599 = vmatpush.bf16.msra.mxu0 0
        %600 = vmatpush.bf16.msra.mxu0 %v587
        %601 = vmatpush.bf16.msra.mxu0 %v586
        %602 = vmatmul.bf16.gmra.mxu0 %v592
        %v603 = vpop.f32.mrf.mxu0
        %v604 = vadd.f32 %v571, %v603
        %v605 = vpop.f32.mrf.mxu0
        %v606 = vadd.f32 %v571, %v605
        %607 = vdwg.mxu0
        %v608 = vld [vmem:[#allocation11] sm:$0xf]
        %v609 = vld [vmem:[#allocation11 + $0x4] sm:$0xf]
        %v610 = vld [vmem:[#allocation11 + $0x8] sm:$0xf]
        %v611 = vld [vmem:[#allocation11 + $0xc] sm:$0xf]
        %v612 = vld [vmem:[%s6] sm:$0x1]
        %v614 = vperm.slane %v612, 0
        %v618 = vunpack.c.l.b16 %v561
        %v619 = vunpack.c.l.b16 %v562
        %v620 = vpack.c.b16 %v619, %v618
        %v625 = vunpack.c.l.b16 %v608
        %v626 = vunpack.c.l.b16 %v609
        %v627 = vunpack.c.l.b16 %v610
        %v628 = vunpack.c.l.b16 %v611
        %v629 = vpack.c.b16 %v626, %v625
        %v630 = vpack.c.b16 %v628, %v627
        %v634 = vsel %vm590, %v620, 0
        %636 = vmatpush.bf16.msra.mxu0 0
        %637 = vmatpush.bf16.msra.mxu0 0
        %638 = vmatpush.bf16.msra.mxu0 0
        %639 = vmatpush.bf16.msra.mxu0 0
        %640 = vmatpush.bf16.msra.mxu0 0
        %641 = vmatpush.bf16.msra.mxu0 0
        %642 = vmatpush.bf16.msra.mxu0 %v630
        %643 = vmatpush.bf16.msra.mxu0 %v629
        %644 = vmatmul.bf16.gmra.mxu0 %v634
        %v645 = vpop.f32.mrf.mxu0
        %v646 = vadd.f32 %v614, %v645
        %v647 = vpop.f32.mrf.mxu0
        %v648 = vadd.f32 %v614, %v647
        %649 = vdwg.mxu0
        %v650 = vld [vmem:[#allocation12] sm:$0xf]
        %v651 = vld [vmem:[#allocation12 + $0x4] sm:$0xf]
        %v652 = vld [vmem:[#allocation12 + $0x8] sm:$0xf]
        %v653 = vld [vmem:[#allocation12 + $0xc] sm:$0xf]
        %v654 = vld [vmem:[%s8] sm:$0x1]
        %v656 = vperm.slane %v654, 0
        %v660 = vunpack.c.l.b16 %v563
        %v661 = vunpack.c.l.b16 %v564
        %v662 = vpack.c.b16 %v661, %v660
        %v667 = vunpack.c.l.b16 %v650
        %v668 = vunpack.c.l.b16 %v651
        %v669 = vunpack.c.l.b16 %v652
        %v670 = vunpack.c.l.b16 %v653
        %v671 = vpack.c.b16 %v668, %v667
        %v672 = vpack.c.b16 %v670, %v669
        %v676 = vsel %vm590, %v662, 0
        %678 = vmatpush.bf16.msra.mxu0 0
        %679 = vmatpush.bf16.msra.mxu0 0
        %680 = vmatpush.bf16.msra.mxu0 0
        %681 = vmatpush.bf16.msra.mxu0 0
        %682 = vmatpush.bf16.msra.mxu0 0
        %683 = vmatpush.bf16.msra.mxu0 0
        %684 = vmatpush.bf16.msra.mxu0 %v672
        %685 = vmatpush.bf16.msra.mxu0 %v671
        %686 = vmatmul.bf16.gmra.mxu0 %v676
        %v687 = vpop.f32.mrf.mxu0
        %v688 = vadd.f32 %v656, %v687
        %v689 = vpop.f32.mrf.mxu0
        %v690 = vadd.f32 %v656, %v689
        %691 = vdwg.mxu0
        %v692 = vmul.f32 %v604, 0.35355338
        %v693 = vmul.f32 %v606, 0.35355338
        %v694 = vpack.c.bf16 %v692, %v692
        %v695 = vpack.c.bf16 %v693, %v693
        %v696 = vpack.c.bf16 %v646, %v646
        %v697 = vpack.c.bf16 %v648, %v648
        %v698 = vpack.c.bf16 %v688, %v688
        %v699 = vpack.c.bf16 %v690, %v690
        %vm700 = vcmask 64512
        %v702 = vsel %vm700, %v694, 0
        %v705 = vsel %vm700, %v696, 0
        %707 = vmatpush.bf16.xpose.msra.mxu0 0
        %708 = vmatpush.bf16.xpose.msra.mxu0 0
        %709 = vmatpush.bf16.xpose.msra.mxu0 0
        %710 = vmatpush.bf16.xpose.msra.mxu0 0
        %711 = vmatpush.bf16.xpose.msra.mxu0 0
        %712 = vmatpush.bf16.xpose.msra.mxu0 0
        %713 = vmatpush.bf16.xpose.msra.mxu0 0
        %714 = vmatpush.bf16.xpose.msra.mxu0 %v705
        %715 = vmatmul.bf16.gmra.mxu0 %v702
        %v716 = vpop.f32.mrf.mxu0
        %v717 = vadd.f32 0.0, %v716
        %v718 = vpop.f32.mrf.mxu0
        %719 = vdwg.mxu0
        %v721 = vsel %vm700, %v695, 0
        %v724 = vsel %vm700, %v697, 0
        %726 = vmatpush.bf16.xpose.msra.mxu0 0
        %727 = vmatpush.bf16.xpose.msra.mxu0 0
        %728 = vmatpush.bf16.xpose.msra.mxu0 0
        %729 = vmatpush.bf16.xpose.msra.mxu0 0
        %730 = vmatpush.bf16.xpose.msra.mxu0 0
        %731 = vmatpush.bf16.xpose.msra.mxu0 0
        %732 = vmatpush.bf16.xpose.msra.mxu0 0
        %733 = vmatpush.bf16.xpose.msra.mxu0 %v724
        %734 = vmatmul.bf16.gmra.mxu0 %v721
        %v735 = vpop.f32.mrf.mxu0
        %v736 = vadd.f32 0.0, %v735
        %v737 = vpop.f32.mrf.mxu0
        %738 = vdwg.mxu0
        %v739 = vsel %vm700, %v717, -inf
        %740 = vmax.xlane.f32.xlu0 %v739
        %v741 = vpop.xlane.xlu0 %740
        %v742 = vsel %vm700, %v736, -inf
        %743 = vmax.xlane.f32.xlu0 %v742
        %v744 = vpop.xlane.xlu0 %743
        %v745 = vsub.f32 %v717, %v741
        %v746 = vsub.f32 %v736, %v744
        %v747 = vmul.f32 %v745, 1.442695
        %v748 = vpow.pop %v747
        %v749 = vmul.f32 %v746, 1.442695
        %v750 = vpow.pop %v749
        %v751 = vsel %vm700, %v748, 0.0
        %752 = vadd.xlane.f32.xlu0 %v751
        %v753 = vpop.xlane.xlu0 %752
        %v754 = vsel %vm700, %v750, 0.0
        %755 = vadd.xlane.f32.xlu0 %v754
        %v756 = vpop.xlane.xlu0 %755
        %v757 = vrcp.pop %v753
        %v758 = vrcp.pop %v756
        %v759 = vmul.f32 %v748, %v757
        %v760 = vmul.f32 %v750, %v758
        %v761 = vpack.c.bf16 %v759, %v759
        %v762 = vpack.c.bf16 %v760, %v760
        %v764 = vsel %vm700, %v761, 0
        %vm766 = vcmask 1043456
        %v768 = vsel %vm766, %v698, 0
        %770 = vmatpush.bf16.msra.mxu0 0
        %771 = vmatpush.bf16.msra.mxu0 0
        %772 = vmatpush.bf16.msra.mxu0 0
        %773 = vmatpush.bf16.msra.mxu0 0
        %774 = vmatpush.bf16.msra.mxu0 0
        %775 = vmatpush.bf16.msra.mxu0 0
        %776 = vmatpush.bf16.msra.mxu0 0
        %777 = vmatpush.bf16.msra.mxu0 %v768
        %778 = vmatmul.bf16.gmra.mxu0 %v764
        %v779 = vpop.f32.mrf.mxu0
        %v780 = vadd.f32 0.0, %v779
        %v781 = vpop.f32.mrf.mxu0
        %782 = vdwg.mxu0
        %v784 = vsel %vm700, %v762, 0
        %v787 = vsel %vm766, %v699, 0
        %789 = vmatpush.bf16.msra.mxu0 0
        %790 = vmatpush.bf16.msra.mxu0 0
        %791 = vmatpush.bf16.msra.mxu0 0
        %792 = vmatpush.bf16.msra.mxu0 0
        %793 = vmatpush.bf16.msra.mxu0 0
        %794 = vmatpush.bf16.msra.mxu0 0
        %795 = vmatpush.bf16.msra.mxu0 0
        %796 = vmatpush.bf16.msra.mxu0 %v787
        %797 = vmatmul.bf16.gmra.mxu0 %v784
        %v798 = vpop.f32.mrf.mxu0
        %v799 = vadd.f32 0.0, %v798
        %v800 = vpop.f32.mrf.mxu0
        %801 = vdwg.mxu0
        %v802 = vpack.c.bf16 %v780, %v780
        %v803 = vpack.c.bf16 %v799, %v799
        %vm804 = vcmask 60416
        %805 = vst.msk [vmem:[#allocation2] sm:$0xf] %vm804, %v802
        %806 = vst.msk [vmem:[#allocation2 + $0x4] sm:$0xf] %vm804, %v803
        %v808 = vunpack.c.l.b16 %v694
        %v809 = vpack.c.b16 %v808, %v808
        %810 = vrot.lane.b32.xlu0 %v809, 120
        %v811 = vpop.permute.xlu0 %810
        %v813 = vunpack.c.l.b16 %v696
        %v814 = vpack.c.b16 %v813, %v813
        %815 = vrot.lane.b32.xlu0 %v814, 120
        %v816 = vpop.permute.xlu0 %815
        %v818 = vsel %vm700, %v811, 0
        %v821 = vsel %vm700, %v816, 0
        %823 = vmatpush.bf16.xpose.msra.mxu0 0
        %824 = vmatpush.bf16.xpose.msra.mxu0 0
        %825 = vmatpush.bf16.xpose.msra.mxu0 0
        %826 = vmatpush.bf16.xpose.msra.mxu0 0
        %827 = vmatpush.bf16.xpose.msra.mxu0 0
        %828 = vmatpush.bf16.xpose.msra.mxu0 0
        %829 = vmatpush.bf16.xpose.msra.mxu0 0
        %830 = vmatpush.bf16.xpose.msra.mxu0 %v821
        %831 = vmatmul.bf16.gmra.mxu0 %v818
        %v832 = vpop.f32.mrf.mxu0
        %v833 = vadd.f32 0.0, %v832
        %v834 = vpop.f32.mrf.mxu0
        %835 = vdwg.mxu0
        %v837 = vunpack.c.l.b16 %v695
        %v838 = vpack.c.b16 %v837, %v837
        %839 = vrot.lane.b32.xlu0 %v838, 120
        %v840 = vpop.permute.xlu0 %839
        %v842 = vunpack.c.l.b16 %v697
        %v843 = vpack.c.b16 %v842, %v842
        %844 = vrot.lane.b32.xlu0 %v843, 120
        %v845 = vpop.permute.xlu0 %844
        %v847 = vsel %vm700, %v840, 0
        %v850 = vsel %vm700, %v845, 0
        %852 = vmatpush.bf16.xpose.msra.mxu0 0
        %853 = vmatpush.bf16.xpose.msra.mxu0 0
        %854 = vmatpush.bf16.xpose.msra.mxu0 0
        %855 = vmatpush.bf16.xpose.msra.mxu0 0
        %856 = vmatpush.bf16.xpose.msra.mxu0 0
        %857 = vmatpush.bf16.xpose.msra.mxu0 0
        %858 = vmatpush.bf16.xpose.msra.mxu0 0
        %859 = vmatpush.bf16.xpose.msra.mxu0 %v850
        %860 = vmatmul.bf16.gmra.mxu0 %v847
        %v861 = vpop.f32.mrf.mxu0
        %v862 = vadd.f32 0.0, %v861
        %v863 = vpop.f32.mrf.mxu0
        %864 = vdwg.mxu0
        %v865 = vsel %vm700, %v833, -inf
        %866 = vmax.xlane.f32.xlu0 %v865
        %v867 = vpop.xlane.xlu0 %866
        %v868 = vsel %vm700, %v862, -inf
        %869 = vmax.xlane.f32.xlu0 %v868
        %v870 = vpop.xlane.xlu0 %869
        %v871 = vsub.f32 %v833, %v867
        %v872 = vsub.f32 %v862, %v870
        %v873 = vmul.f32 %v871, 1.442695
        %v874 = vpow.pop %v873
        %v875 = vmul.f32 %v872, 1.442695
        %v876 = vpow.pop %v875
        %v877 = vsel %vm700, %v874, 0.0
        %878 = vadd.xlane.f32.xlu0 %v877
        %v879 = vpop.xlane.xlu0 %878
        %v880 = vsel %vm700, %v876, 0.0
        %881 = vadd.xlane.f32.xlu0 %v880
        %v882 = vpop.xlane.xlu0 %881
        %v883 = vrcp.pop %v879
        %v884 = vrcp.pop %v882
        %v885 = vmul.f32 %v874, %v883
        %v886 = vmul.f32 %v876, %v884
        %v887 = vpack.c.bf16 %v885, %v885
        %v888 = vpack.c.bf16 %v886, %v886
        %v890 = vunpack.c.l.b16 %v698
        %v891 = vpack.c.b16 %v890, %v890
        %892 = vrot.lane.b32.xlu0 %v891, 120
        %v893 = vpop.permute.xlu0 %892
        %v895 = vsel %vm700, %v887, 0
        %v898 = vsel %vm766, %v893, 0
        %900 = vmatpush.bf16.msra.mxu0 0
        %901 = vmatpush.bf16.msra.mxu0 0
        %902 = vmatpush.bf16.msra.mxu0 0
        %903 = vmatpush.bf16.msra.mxu0 0
        %904 = vmatpush.bf16.msra.mxu0 0
        %905 = vmatpush.bf16.msra.mxu0 0
        %906 = vmatpush.bf16.msra.mxu0 0
        %907 = vmatpush.bf16.msra.mxu0 %v898
        %908 = vmatmul.bf16.gmra.mxu0 %v895
        %v909 = vpop.f32.mrf.mxu0
        %v910 = vadd.f32 0.0, %v909
        %v911 = vpop.f32.mrf.mxu0
        %912 = vdwg.mxu0
        %v914 = vunpack.c.l.b16 %v699
        %v915 = vpack.c.b16 %v914, %v914
        %916 = vrot.lane.b32.xlu0 %v915, 120
        %v917 = vpop.permute.xlu0 %916
        %v919 = vsel %vm700, %v888, 0
        %v922 = vsel %vm766, %v917, 0
        %924 = vmatpush.bf16.msra.mxu0 0
        %925 = vmatpush.bf16.msra.mxu0 0
        %926 = vmatpush.bf16.msra.mxu0 0
        %927 = vmatpush.bf16.msra.mxu0 0
        %928 = vmatpush.bf16.msra.mxu0 0
        %929 = vmatpush.bf16.msra.mxu0 0
        %930 = vmatpush.bf16.msra.mxu0 0
        %931 = vmatpush.bf16.msra.mxu0 %v922
        %932 = vmatmul.bf16.gmra.mxu0 %v919
        %v933 = vpop.f32.mrf.mxu0
        %v934 = vadd.f32 0.0, %v933
        %v935 = vpop.f32.mrf.mxu0
        %936 = vdwg.mxu0
        %v937 = vpack.c.bf16 %v910, %v910
        %v938 = vpack.c.bf16 %v934, %v934
        %941 = vrot.lane.b32.xlu0 %v937, 8
        %v942 = vpop.permute.xlu0 %941
        %943 = vrot.lane.b32.xlu0 %v938, 8
        %v944 = vpop.permute.xlu0 %943
        %vm947 = vcmask 126016
        %948 = vst.msk [vmem:[#allocation2] sm:$0xf] %vm947, %v942
        %949 = vst.msk [vmem:[#allocation2 + $0x4] sm:$0xf] %vm947, %v944
        %950 = vrot.lane.b32.xlu0 %v809, 112
        %v951 = vpop.permute.xlu0 %950
        %952 = vrot.lane.b32.xlu0 %v814, 112
        %v953 = vpop.permute.xlu0 %952
        %v955 = vsel %vm700, %v951, 0
        %v958 = vsel %vm700, %v953, 0
        %960 = vmatpush.bf16.xpose.msra.mxu0 0
        %961 = vmatpush.bf16.xpose.msra.mxu0 0
        %962 = vmatpush.bf16.xpose.msra.mxu0 0
        %963 = vmatpush.bf16.xpose.msra.mxu0 0
        %964 = vmatpush.bf16.xpose.msra.mxu0 0
        %965 = vmatpush.bf16.xpose.msra.mxu0 0
        %966 = vmatpush.bf16.xpose.msra.mxu0 0
        %967 = vmatpush.bf16.xpose.msra.mxu0 %v958
        %968 = vmatmul.bf16.gmra.mxu0 %v955
        %v969 = vpop.f32.mrf.mxu0
        %v970 = vadd.f32 0.0, %v969
        %v971 = vpop.f32.mrf.mxu0
        %972 = vdwg.mxu0
        %973 = vrot.lane.b32.xlu0 %v838, 112
        %v974 = vpop.permute.xlu0 %973
        %975 = vrot.lane.b32.xlu0 %v843, 112
        %v976 = vpop.permute.xlu0 %975
        %v978 = vsel %vm700, %v974, 0
        %v981 = vsel %vm700, %v976, 0
        %983 = vmatpush.bf16.xpose.msra.mxu0 0
        %984 = vmatpush.bf16.xpose.msra.mxu0 0
        %985 = vmatpush.bf16.xpose.msra.mxu0 0
        %986 = vmatpush.bf16.xpose.msra.mxu0 0
        %987 = vmatpush.bf16.xpose.msra.mxu0 0
        %988 = vmatpush.bf16.xpose.msra.mxu0 0
        %989 = vmatpush.bf16.xpose.msra.mxu0 0
        %990 = vmatpush.bf16.xpose.msra.mxu0 %v981
        %991 = vmatmul.bf16.gmra.mxu0 %v978
        %v992 = vpop.f32.mrf.mxu0
        %v993 = vadd.f32 0.0, %v992
        %v994 = vpop.f32.mrf.mxu0
        %995 = vdwg.mxu0
        %v996 = vsel %vm700, %v970, -inf
        %997 = vmax.xlane.f32.xlu0 %v996
        %v998 = vpop.xlane.xlu0 %997
        %v999 = vsel %vm700, %v993, -inf
        %1000 = vmax.xlane.f32.xlu0 %v999
        %v1001 = vpop.xlane.xlu0 %1000
        %v1002 = vsub.f32 %v970, %v998
        %v1003 = vsub.f32 %v993, %v1001
        %v1004 = vmul.f32 %v1002, 1.442695
        %v1005 = vpow.pop %v1004
        %v1006 = vmul.f32 %v1003, 1.442695
        %v1007 = vpow.pop %v1006
        %v1008 = vsel %vm700, %v1005, 0.0
        %1009 = vadd.xlane.f32.xlu0 %v1008
        %v1010 = vpop.xlane.xlu0 %1009
        %v1011 = vsel %vm700, %v1007, 0.0
        %1012 = vadd.xlane.f32.xlu0 %v1011
        %v1013 = vpop.xlane.xlu0 %1012
        %v1014 = vrcp.pop %v1010
        %v1015 = vrcp.pop %v1013
        %v1016 = vmul.f32 %v1005, %v1014
        %v1017 = vmul.f32 %v1007, %v1015
        %v1018 = vpack.c.bf16 %v1016, %v1016
        %v1019 = vpack.c.bf16 %v1017, %v1017
        %1020 = vrot.lane.b32.xlu0 %v891, 112
        %v1021 = vpop.permute.xlu0 %1020
        %v1023 = vsel %vm700, %v1018, 0
        %v1026 = vsel %vm766, %v1021, 0
        %1028 = vmatpush.bf16.msra.mxu0 0
        %1029 = vmatpush.bf16.msra.mxu0 0
        %1030 = vmatpush.bf16.msra.mxu0 0
        %1031 = vmatpush.bf16.msra.mxu0 0
        %1032 = vmatpush.bf16.msra.mxu0 0
        %1033 = vmatpush.bf16.msra.mxu0 0
        %1034 = vmatpush.bf16.msra.mxu0 0
        %1035 = vmatpush.bf16.msra.mxu0 %v1026
        %1036 = vmatmul.bf16.gmra.mxu0 %v1023
        %v1037 = vpop.f32.mrf.mxu0
        %v1038 = vadd.f32 0.0, %v1037
        %v1039 = vpop.f32.mrf.mxu0
        %1040 = vdwg.mxu0
        %1041 = vrot.lane.b32.xlu0 %v915, 112
        %v1042 = vpop.permute.xlu0 %1041
        %v1044 = vsel %vm700, %v1019, 0
        %v1047 = vsel %vm766, %v1042, 0
        %1049 = vmatpush.bf16.msra.mxu0 0
        %1050 = vmatpush.bf16.msra.mxu0 0
        %1051 = vmatpush.bf16.msra.mxu0 0
        %1052 = vmatpush.bf16.msra.mxu0 0
        %1053 = vmatpush.bf16.msra.mxu0 0
        %1054 = vmatpush.bf16.msra.mxu0 0
        %1055 = vmatpush.bf16.msra.mxu0 0
        %1056 = vmatpush.bf16.msra.mxu0 %v1047
        %1057 = vmatmul.bf16.gmra.mxu0 %v1044
        %v1058 = vpop.f32.mrf.mxu0
        %v1059 = vadd.f32 0.0, %v1058
        %v1060 = vpop.f32.mrf.mxu0
        %1061 = vdwg.mxu0
        %v1062 = vpack.c.bf16 %v1038, %v1038
        %v1063 = vpack.c.bf16 %v1059, %v1059
        %1066 = vrot.lane.b32.xlu0 %v1062, 16
        %v1067 = vpop.permute.xlu0 %1066
        %1068 = vrot.lane.b32.xlu0 %v1063, 16
        %v1069 = vpop.permute.xlu0 %1068
        %vm1072 = vcmask 191616
        %1073 = vst.msk [vmem:[#allocation2] sm:$0xf] %vm1072, %v1067
        %1074 = vst.msk [vmem:[#allocation2 + $0x4] sm:$0xf] %vm1072, %v1069
        %1075 = vrot.lane.b32.xlu0 %v809, 104
        %v1076 = vpop.permute.xlu0 %1075
        %1077 = vrot.lane.b32.xlu0 %v814, 104
        %v1078 = vpop.permute.xlu0 %1077
        %v1080 = vsel %vm700, %v1076, 0
        %v1083 = vsel %vm700, %v1078, 0
        %1085 = vmatpush.bf16.xpose.msra.mxu0 0
        %1086 = vmatpush.bf16.xpose.msra.mxu0 0
        %1087 = vmatpush.bf16.xpose.msra.mxu0 0
        %1088 = vmatpush.bf16.xpose.msra.mxu0 0
        %1089 = vmatpush.bf16.xpose.msra.mxu0 0
        %1090 = vmatpush.bf16.xpose.msra.mxu0 0
        %1091 = vmatpush.bf16.xpose.msra.mxu0 0
        %1092 = vmatpush.bf16.xpose.msra.mxu0 %v1083
        %1093 = vmatmul.bf16.gmra.mxu0 %v1080
        %v1094 = vpop.f32.mrf.mxu0
        %v1095 = vadd.f32 0.0, %v1094
        %v1096 = vpop.f32.mrf.mxu0
        %1097 = vdwg.mxu0
        %1098 = vrot.lane.b32.xlu0 %v838, 104
        %v1099 = vpop.permute.xlu0 %1098
        %1100 = vrot.lane.b32.xlu0 %v843, 104
        %v1101 = vpop.permute.xlu0 %1100
        %v1103 = vsel %vm700, %v1099, 0
        %v1106 = vsel %vm700, %v1101, 0
        %1108 = vmatpush.bf16.xpose.msra.mxu0 0
        %1109 = vmatpush.bf16.xpose.msra.mxu0 0
        %1110 = vmatpush.bf16.xpose.msra.mxu0 0
        %1111 = vmatpush.bf16.xpose.msra.mxu0 0
        %1112 = vmatpush.bf16.xpose.msra.mxu0 0
        %1113 = vmatpush.bf16.xpose.msra.mxu0 0
        %1114 = vmatpush.bf16.xpose.msra.mxu0 0
        %1115 = vmatpush.bf16.xpose.msra.mxu0 %v1106
        %1116 = vmatmul.bf16.gmra.mxu0 %v1103
        %v1117 = vpop.f32.mrf.mxu0
        %v1118 = vadd.f32 0.0, %v1117
        %v1119 = vpop.f32.mrf.mxu0
        %1120 = vdwg.mxu0
        %v1121 = vsel %vm700, %v1095, -inf
        %1122 = vmax.xlane.f32.xlu0 %v1121
        %v1123 = vpop.xlane.xlu0 %1122
        %v1124 = vsel %vm700, %v1118, -inf
        %1125 = vmax.xlane.f32.xlu0 %v1124
        %v1126 = vpop.xlane.xlu0 %1125
        %v1127 = vsub.f32 %v1095, %v1123
        %v1128 = vsub.f32 %v1118, %v1126
        %v1129 = vmul.f32 %v1127, 1.442695
        %v1130 = vpow.pop %v1129
        %v1131 = vmul.f32 %v1128, 1.442695
        %v1132 = vpow.pop %v1131
        %v1133 = vsel %vm700, %v1130, 0.0
        %1134 = vadd.xlane.f32.xlu0 %v1133
        %v1135 = vpop.xlane.xlu0 %1134
        %v1136 = vsel %vm700, %v1132, 0.0
        %1137 = vadd.xlane.f32.xlu0 %v1136
        %v1138 = vpop.xlane.xlu0 %1137
        %v1139 = vrcp.pop %v1135
        %v1140 = vrcp.pop %v1138
        %v1141 = vmul.f32 %v1130, %v1139
        %v1142 = vmul.f32 %v1132, %v1140
        %v1143 = vpack.c.bf16 %v1141, %v1141
        %v1144 = vpack.c.bf16 %v1142, %v1142
        %1145 = vrot.lane.b32.xlu0 %v891, 104
        %v1146 = vpop.permute.xlu0 %1145
        %v1148 = vsel %vm700, %v1143, 0
        %v1151 = vsel %vm766, %v1146, 0
        %1153 = vmatpush.bf16.msra.mxu0 0
        %1154 = vmatpush.bf16.msra.mxu0 0
        %1155 = vmatpush.bf16.msra.mxu0 0
        %1156 = vmatpush.bf16.msra.mxu0 0
        %1157 = vmatpush.bf16.msra.mxu0 0
        %1158 = vmatpush.bf16.msra.mxu0 0
        %1159 = vmatpush.bf16.msra.mxu0 0
        %1160 = vmatpush.bf16.msra.mxu0 %v1151
        %1161 = vmatmul.bf16.gmra.mxu0 %v1148
        %v1162 = vpop.f32.mrf.mxu0
        %v1163 = vadd.f32 0.0, %v1162
        %v1164 = vpop.f32.mrf.mxu0
        %1165 = vdwg.mxu0
        %1166 = vrot.lane.b32.xlu0 %v915, 104
        %v1167 = vpop.permute.xlu0 %1166
        %v1169 = vsel %vm700, %v1144, 0
        %v1172 = vsel %vm766, %v1167, 0
        %1174 = vmatpush.bf16.msra.mxu0 0
        %1175 = vmatpush.bf16.msra.mxu0 0
        %1176 = vmatpush.bf16.msra.mxu0 0
        %1177 = vmatpush.bf16.msra.mxu0 0
        %1178 = vmatpush.bf16.msra.mxu0 0
        %1179 = vmatpush.bf16.msra.mxu0 0
        %1180 = vmatpush.bf16.msra.mxu0 0
        %1181 = vmatpush.bf16.msra.mxu0 %v1172
        %1182 = vmatmul.bf16.gmra.mxu0 %v1169
        %v1183 = vpop.f32.mrf.mxu0
        %v1184 = vadd.f32 0.0, %v1183
        %v1185 = vpop.f32.mrf.mxu0
        %1186 = vdwg.mxu0
        %v1187 = vpack.c.bf16 %v1163, %v1163
        %v1188 = vpack.c.bf16 %v1184, %v1184
        %1191 = vrot.lane.b32.xlu0 %v1187, 24
        %v1192 = vpop.permute.xlu0 %1191
        %1193 = vrot.lane.b32.xlu0 %v1188, 24
        %v1194 = vpop.permute.xlu0 %1193
        %vm1197 = vcmask 257216
        %1198 = vst.msk [vmem:[#allocation2] sm:$0xf] %vm1197, %v1192
        %1199 = vst.msk [vmem:[#allocation2 + $0x4] sm:$0xf] %vm1197, %v1194
        %v1200 = vld [vmem:[#allocation2] sm:$0xf]
        %v1201 = vld [vmem:[#allocation2 + $0x4] sm:$0xf]
        %v1202 = vld [vmem:[#allocation14] sm:$0xf]
        %v1203 = vld [vmem:[#allocation14 + $0x4] sm:$0xf]
        %v1204 = vld [vmem:[#allocation14 + $0x8] sm:$0xf]
        %v1205 = vld [vmem:[#allocation14 + $0xc] sm:$0xf]
        %v1206 = vld [vmem:[%s10] sm:$0x1]
        %v1208 = vperm.slane %v1206, 0
        %v1212 = vunpack.c.l.b16 %v1200
        %v1213 = vunpack.c.l.b16 %v1201
        %v1214 = vpack.c.b16 %v1213, %v1212
        %v1219 = vunpack.c.l.b16 %v1202
        %v1220 = vunpack.c.l.b16 %v1203
        %v1221 = vunpack.c.l.b16 %v1204
        %v1222 = vunpack.c.l.b16 %v1205
        %v1223 = vpack.c.b16 %v1220, %v1219
        %v1224 = vpack.c.b16 %v1222, %v1221
        %v1228 = vsel %vm590, %v1214, 0
        %1230 = vmatpush.bf16.msra.mxu0 0
        %1231 = vmatpush.bf16.msra.mxu0 0
        %1232 = vmatpush.bf16.msra.mxu0 0
        %1233 = vmatpush.bf16.msra.mxu0 0
        %1234 = vmatpush.bf16.msra.mxu0 0
        %1235 = vmatpush.bf16.msra.mxu0 0
        %1236 = vmatpush.bf16.msra.mxu0 %v1224
        %1237 = vmatpush.bf16.msra.mxu0 %v1223
        %1238 = vmatmul.bf16.gmra.mxu0 %v1228
        %v1239 = vpop.f32.mrf.mxu0
        %v1240 = vadd.f32 %v1208, %v1239
        %v1241 = vpop.f32.mrf.mxu0
        %v1242 = vadd.f32 %v1208, %v1241
        %1243 = vdwg.mxu0
        %1244 = vst.msk [vmem:[%s553] sm:$0xff] %vm590, %v1240
        %1245 = vst.msk [vmem:[%s553 + $0x8] sm:$0xff] %vm590, %v1242
        %s1246 = sand.u32 %s287, 1
        %s1247 = scalar_lea.sflag [#allocation5], %s1246
        %s1248 = sand.u32 %s287, 1
        %s1249 = smul.addr %s1248, 16
        %s1250 = scalar_lea.vmem [#allocation15], %s1249
        // Predicated region
        $region93: #{tpu_custom_call.1} parent=63 // pred_check
          %p1251 = pneg %p297
        $region94: #{tpu_custom_call.1} parent=63 // pred_check_branch
          %1253 = sbr.rel (%p1251) target = $region96
        $region95: #{tpu_custom_call.1} parent=63 // pred_region
          %s1254 = smul.u32 2, %s33
          %1256 = vsyncadd %s1247, 0
          %s1257 = smul.addr %s1254, 8
          %s1258 = scalar_lea.hbm %s11, %s1257
          %s1259 = sshll.u32 %s1250, 4
          %s1260 = int_to_ptr.vmem [resolvable:$true] %s1259
          %s1261 = sshll.u32 %s1258, 4
          %s1262 = int_to_ptr.hbm [resolvable:$true] %s1261
          %1267 = dma.vmem_to_hbm [thread:$0]  %s1260, 256, %s1262, %s1247, 128, 128, 8
        $region96: #{tpu_custom_call.1} parent=63 // pred_fallthru
          _
      $region64: #{tpu_custom_call.1} parent=5 // pred_fallthru
        _
      %p1268 = scmp.le.s32.totalorder 2, %s28
      // Predicated region
      $region97: #{tpu_custom_call.1} parent=5 // pred_check
        %p1269 = pneg %p1268
      $region98: #{tpu_custom_call.1} parent=5 // pred_check_branch
        %1271 = sbr.rel (%p1269) target = $region100
      $region99: #{tpu_custom_call.1} parent=5 // pred_region
        %s1272 = ssub.s32 %s28, 2
        // Predicated region
        $region101: #{tpu_custom_call.1} parent=99 // pred_check
          %p1273 = pneg %p303
        $region102: #{tpu_custom_call.1} parent=99 // pred_check_branch
          %1275 = sbr.rel (%p1273) target = $region104
        $region103: #{tpu_custom_call.1} parent=99 // pred_region
          %s1276 = sand.u32 %s288, 1
          %s1277 = scalar_lea.sflag [#allocation5], %s1276
          %s1278 = sand.u32 %s288, 1
          %s1279 = smul.addr %s1278, 16
          %s1280 = scalar_lea.vmem [#allocation15], %s1279
          %1282 = dma.done %s1277, 256
        $region104: #{tpu_custom_call.1} parent=99 // pred_fallthru
          _
      $region100: #{tpu_custom_call.1} parent=5 // pred_fallthru
        _
    $region6: #{tpu_custom_call.1} parent=1 // loop_footer
      %s32 = sadd.s32 1, %s28
    $region7: #{tpu_custom_call.1} parent=1 // loop_footer_branch
      %27 = sbr.rel target = $region3
    $region8: #{tpu_custom_call.1} parent=1 // loop_exit
      _
    %1283 = vsyncpa [#allocation4], 1
    %s1284 = scalar_lea.sflag [#allocation4], 1
    %1285 = vsyncpa %s1284, 1
    %1286 = vsyncpa [#allocation7], 1
    %s1287 = scalar_lea.sflag [#allocation7], 1
    %1288 = vsyncpa %s1287, 1
    %1289 = vsyncpa [#allocation10], 1
    %1290 = vsyncpa [#allocation13], 1
    %1291 = vsyncpa [#allocation5], 1
    %s1292 = scalar_lea.sflag [#allocation5], 1
    %1293 = vsyncpa %s1292, 1

</llo_original>
